<compile_context>
chip_gen: v7x
topology: tpu7x:2x2x1
jax: 0.10.0
libtpu: 0.0.40
codegen_flags: <defaults>
</compile_context>

<pallas_src>
import jax
import jax.numpy as jnp
from jax import lax
from jax.experimental import pallas as pl
from jax.experimental.pallas import tpu as pltpu

# ----------------------- configuration (small, consistent with DirectSR) ----------------------
N_SOURCE = 16                  # n_source_nodes: number of nodes AND conv1 in/out per-head dim
N_TARGET = 32                  # n_target_nodes
NUM_HEADS = 2                  # num_heads
EDGE_DIM = 2                   # edge_dim
C1 = N_SOURCE                  # conv1 per-head out channels
C2 = N_TARGET // NUM_HEADS     # conv2 per-head out channels
F1 = N_SOURCE                  # conv1 in_channels
F2 = NUM_HEADS * C1            # conv2 in_channels (= heads * n_source_nodes)
HC1 = NUM_HEADS * C1           # 32
HC2 = NUM_HEADS * C2           # 32 == N_TARGET
GN_EPS = 1e-5                  # PyG GraphNorm eps
NEG_INF = -1e30
LANES = 128

# ---- packed-parameter slab layout (rows of a [TOTAL_ROWS, 128] f32 slab) ----------------------
# rows 0:16    fused projection weight conv1   [F1, 128]  cols = [Q0|Q1|K0|K1|V0|V1|skip]
# rows 16:48   fused projection weight conv2   [F2, 128]
# rows VB..    per-layer vector block (13 rows), see ROW_* offsets below
W1_ROW0 = 0
W2_ROW0 = F1              # 16
VB1 = F1 + F2             # 48  (conv1 vector block)
VB2 = 64                  # 8-aligned start for conv2's vector block
TOTAL_ROWS = 80

# vector-block row offsets (relative to VB)
ROW_BF = 0                                   # fused projection bias                 [1, 128]
ROW_WET = 1                                  # lin_edge rows, Q-block aligned:       [E*H, 128]
                                             #   we[d,h] at lanes h*C:(h+1)*C (zeros elsewhere)
ROW_GN = ROW_WET + EDGE_DIM * NUM_HEADS      # GraphNorm weight / bias / mean_scale  (lanes 0:HC)
ROW_BETA = ROW_GN + 3                        # [lin_beta(out) | lin_beta(skip)]      (lanes 0:2HC)
ROW_WEU = ROW_BETA + 1                       # lin_edge rows, lane-0 aligned:        [E*H, C]
VEC_ROWS = ROW_WEU + EDGE_DIM * NUM_HEADS    # 13

# data-tile column layout ([N_SOURCE, 128], built by the wrapper): [x | neg_mask | e0 | e1 | 0]
COL_X = 0
COL_MASK = N_SOURCE
COL_E0 = 2 * N_SOURCE


# -------------------------------------- kernel helpers ----------------------------------------
def _tconv(x, e_list, neg_add, p_ref, w_row0, fin, vb, c_out):
    """PyG TransformerConv (concat=True, root_weight=True, beta=True), eval mode."""
    heads, ed = NUM_HEADS, EDGE_DIM
    hc = heads * c_out
    n = x.shape[0]
    scale = 1.0 / (float(c_out) ** 0.5)

    # One lane-dense 128-wide projection: [Q_h0|Q_h1|K_h0|K_h1|V_h0|V_h1|skip]
    wf = p_ref[w_row0:w_row0 + fin, :]                                   # [fin, 128]
    bf = p_ref[vb + ROW_BF:vb + ROW_BF + 1, :]                           # [1, 128]
    proj = jnp.dot(x, wf, preferred_element_type=jnp.float32) + bf       # [N, 128]

    # q . (W_e e) coefficients for every (d, h) pair in one MXU dot over the FULL 128 lanes
    # (wet rows are zero outside the Q block, so no q slice is needed).
    wet = p_ref[vb + ROW_WET:vb + ROW_WET + ed * heads, :]               # [E*H, 128]
    qwe = lax.dot_general(proj, wet, (((1,), (1,)), ((), ())),
                          preferred_element_type=jnp.float32)            # [N, E*H]

    # lane-0 aligned lin_edge rows for the value-side edge term
    we_un = p_ref[vb + ROW_WEU:vb + ROW_WEU + ed * heads, 0:c_out]       # [E*H, C]

    outs = []
    for h in range(heads):                                               # static head loop
        qh = proj[:, h * c_out:(h + 1) * c_out]
        kh = proj[:, hc + h * c_out:hc + (h + 1) * c_out]
        vh = proj[:, 2 * hc + h * c_out:2 * hc + (h + 1) * c_out]
        # scores[i, j] = q_i . (k_j + W_e e_ij)
        s = lax.dot_general(qh, kh, (((1,), (1,)), ((), ())),
                            preferred_element_type=jnp.float32)          # [N, N]
        for d in range(ed):                                              # static edge-dim loop
            idx = d * heads + h
            s = s + e_list[d] * qwe[:, idx:idx + 1]
        s = s * scale + neg_add                    # additive mask precomputed host-side
        m = jnp.max(s, axis=1, keepdims=True)
        p = jnp.exp(s - m)                         # masked entries underflow to exactly 0
        l = jnp.maximum(jnp.sum(p, axis=1, keepdims=True), 1e-30)
        inv_l = pl.reciprocal(l, approx=True)      # EUP slot instead of VPU divide chain
        # TODO(synk): dropout on the attention weights skipped (eval-mode identity)
        # value-side edge terms folded into the attention matmul (one MXU push, no XLU reduce):
        #   num = [p | p*e0 | p*e1] @ [vh ; 1(x)we0 ; 1(x)we1]
        p_aug = jnp.concatenate([p] + [p * e_list[d] for d in range(ed)],
                                axis=1)                                  # [N, (1+E)*N]
        v_aug = jnp.concatenate(
            [vh] + [jnp.broadcast_to(we_un[d * heads + h:d * heads + h + 1, :], (n, c_out))
                    for d in range(ed)], axis=0)                         # [(1+E)*N, C]
        num = jnp.dot(p_aug, v_aug, preferred_element_type=jnp.float32)  # [N, C]
        outs.append(num * inv_l)
    out = jnp.concatenate(outs, axis=1)            # head concat in registers (no scratch)
    skip = proj[:, 3 * hc:3 * hc + hc]

    # beta = sigmoid(lin_beta(cat([out, skip, out - skip]))) folded into ONE tiny MXU dot
    wbcat = p_ref[vb + ROW_BETA:vb + ROW_BETA + 1, 0:2 * hc]             # [1, 2*HC]
    gate = lax.dot_general(jnp.concatenate([out, skip], axis=1), wbcat,
                           (((1,), (1,)), ((), ())),
                           preferred_element_type=jnp.float32)           # [N, 1]
    beta = jax.nn.sigmoid(gate)
    return beta * skip + (1.0 - beta) * out


def _graph_norm(x, p_ref, vb, hc):
    """PyG GraphNorm, single graph (batch = all zeros)."""
    gw = p_ref[vb + ROW_GN + 0:vb + ROW_GN + 1, 0:hc]
    gb = p_ref[vb + ROW_GN + 1:vb + ROW_GN + 2, 0:hc]
    gms = p_ref[vb + ROW_GN + 2:vb + ROW_GN + 3, 0:hc]
    mean = jnp.mean(x, axis=0, keepdims=True)
    cen = x - mean * gms
    var = jnp.mean(cen * cen, axis=0, keepdims=True)
    return gw * cen * lax.rsqrt(var + GN_EPS) + gb


def direct_sr_kernel(p_ref, d_ref, out_ref):
    data = d_ref[...]                                           # [N, 128] lane-dense data tile
    x = data[:, COL_X:COL_X + N_SOURCE]                         # [N, F1]
    neg_add = data[:, COL_MASK:COL_MASK + N_SOURCE]             # additive mask (0 / -1e30)
    e_list = [data[:, COL_E0 + d * N_SOURCE:COL_E0 + (d + 1) * N_SOURCE]
              for d in range(EDGE_DIM)]                         # EDGE_DIM x [N, N]

    h = _tconv(x, e_list, neg_add, p_ref, W1_ROW0, F1, VB1, C1)
    h = jnp.maximum(_graph_norm(h, p_ref, VB1, HC1), 0.0)       # bn1 + relu

    h = _tconv(h, e_list, neg_add, p_ref, W2_ROW0, F2, VB2, C2)
    h = jnp.maximum(_graph_norm(h, p_ref, VB2, HC2), 0.0)       # bn2 + relu

    # xt = x.T @ x  (contract over the node axis)
    xt = lax.dot_general(h, h, (((0,), (0,)), ((), ())), preferred_element_type=jnp.float32)
    xt_min = jnp.min(jnp.min(xt, axis=1, keepdims=True), axis=0, keepdims=True)
    xt_max = jnp.max(jnp.max(xt, axis=1, keepdims=True), axis=0, keepdims=True)
    inv_rng = pl.reciprocal(xt_max - xt_min + 1e-8, approx=True)
    res = (xt - xt_min) * inv_rng
    # lane-dense (32, 128) store; wrapper slices the first N_TARGET lanes
    out_ref[...] = jnp.concatenate(
        [res, jnp.zeros((HC2, LANES - HC2), jnp.float32)], axis=1)


# ------------------------------------------ wrapper --------------------------------------------
def direct_sr_forward(x, mask, e_dense, param_slab, target_m):
    # Pack the three data inputs into ONE lane-dense [N, 128] tile (prologue = 2 DMAs total),
    # and precompute the additive neg-mask so the kernel has no select.
    neg_add = jnp.where(mask > 0.0, 0.0, NEG_INF).astype(jnp.float32)
    data = jnp.concatenate([x, neg_add] + [e_dense[d] for d in range(EDGE_DIM)], axis=1)
    data = jnp.pad(data, ((0, 0), (0, LANES - data.shape[1])))

    vmem = pl.BlockSpec(memory_space=pltpu.MemorySpace.VMEM)
    pred = pl.pallas_call(
        direct_sr_kernel,
        out_shape=jax.ShapeDtypeStruct((HC2, LANES), jnp.float32),
        in_specs=[vmem, vmem],
        out_specs=vmem,
        cost_estimate=pl.CostEstimate(flops=350_000, transcendentals=1_300,
                                      bytes_accessed=66_000),
    )(param_slab, data)
    return pred[:, :HC2], target_m


# ----------------------------- parameter packing (host side) -----------------------------------
def pack_params(params):
    """Pack the 28 per-tensor parameters into one [TOTAL_ROWS, 128] f32 slab (1 DMA)."""
    def pad_row(r):
        return jnp.pad(r, ((0, 0), (0, LANES - r.shape[1])))

    def layer_pack(pr, c):
        wq, bq, wk, bk, wv, bv, we, wskip, bskip, wb_out, wb_skip, gw, gb, gms = pr
        wf = jnp.concatenate([wq[h] for h in range(NUM_HEADS)]
                             + [wk[h] for h in range(NUM_HEADS)]
                             + [wv[h] for h in range(NUM_HEADS)]
                             + [wskip], axis=1)                          # [F, 128]
        bf = jnp.concatenate([bq[h] for h in range(NUM_HEADS)]
                             + [bk[h] for h in range(NUM_HEADS)]
                             + [bv[h] for h in range(NUM_HEADS)]
                             + [bskip], axis=1)                          # [1, 128]

        vec_rows = [pad_row(bf)]                                         # ROW_BF
        for d in range(EDGE_DIM):                                        # ROW_WET.. (Q-block aligned)
            for h in range(NUM_HEADS):
                row = jnp.zeros((1, LANES), jnp.float32)
                row = row.at[:, h * c:(h + 1) * c].set(we[d, h])
                vec_rows.append(row)
        for r in (gw, gb, gms):                                          # ROW_GN..
            vec_rows.append(pad_row(r))
        vec_rows.append(pad_row(jnp.concatenate([wb_out, wb_skip], axis=1)))  # ROW_BETA
        for d in range(EDGE_DIM):                                        # ROW_WEU.. (lane-0 aligned)
            for h in range(NUM_HEADS):
                row = jnp.zeros((1, LANES), jnp.float32)
                row = row.at[:, 0:c].set(we[d, h])
                vec_rows.append(row)
        return wf, jnp.concatenate(vec_rows, axis=0)                     # [F,128], [VEC_ROWS,128]

    wf1, vec1 = layer_pack(params[0:14], C1)
    wf2, vec2 = layer_pack(params[14:28], C2)
    slab = jnp.zeros((TOTAL_ROWS, LANES), jnp.float32)
    slab = slab.at[W1_ROW0:W1_ROW0 + F1].set(wf1)
    slab = slab.at[W2_ROW0:W2_ROW0 + F2].set(wf2)
    slab = slab.at[VB1:VB1 + VEC_ROWS].set(vec1)
    slab = slab.at[VB2:VB2 + VEC_ROWS].set(vec2)
    return slab


# ----------------------------- deterministic synthetic parameters ------------------------------
def init_params(key):
    def nrm(k, shape, scale=0.2):
        return scale * jax.random.normal(k, shape, jnp.float32)

    keys = iter(jax.random.split(key, 32))
    params = []
    for fin, c in ((F1, C1), (F2, C2)):
        hc = NUM_HEADS * c
        wq = nrm(next(keys), (NUM_HEADS, fin, c))
        bq = nrm(next(keys), (NUM_HEADS, 1, c), 0.05)
        wk = nrm(next(keys), (NUM_HEADS, fin, c))
        bk = nrm(next(keys), (NUM_HEADS, 1, c), 0.05)
        wv = nrm(next(keys), (NUM_HEADS, fin, c))
        bv = nrm(next(keys), (NUM_HEADS, 1, c), 0.05)
        we = nrm(next(keys), (EDGE_DIM, NUM_HEADS, 1, c))          # lin_edge (no bias)
        wskip = nrm(next(keys), (fin, hc))                         # lin_skip
        bskip = nrm(next(keys), (1, hc), 0.05)
        # lin_beta: Linear(3*hc, 1, bias=False) on cat([out, skip, out - skip])
        wbeta = nrm(next(keys), (3 * hc, 1))
        wa, wb, wc = wbeta[:hc, 0], wbeta[hc:2 * hc, 0], wbeta[2 * hc:, 0]
        wb_out = (wa + wc).reshape(1, hc)                          # multiplies `out`
        wb_skip = (wb - wc).reshape(1, hc)                         # multiplies `skip`
        # GraphNorm(hc): PyG default init (weight=1, bias=0, mean_scale=1)
        gw = jnp.ones((1, hc), jnp.float32)
        gb = jnp.zeros((1, hc), jnp.float32)
        gms = jnp.ones((1, hc), jnp.float32)
        params += [wq, bq, wk, bk, wv, bv, we, wskip, bskip, wb_out, wb_skip, gw, gb, gms]
    return params


# ------------------------------------ pure-JAX reference ---------------------------------------
def reference_forward(x, mask, e_dense, params):
    def tconv(xin, pr, c):
        wq, bq, wk, bk, wv, bv, we, wskip, bskip, wb_out, wb_skip = pr[:11]
        outs = []
        for h in range(NUM_HEADS):
            qh = xin @ wq[h] + bq[h]
            kh = xin @ wk[h] + bk[h]
            vh = xin @ wv[h] + bv[h]
            scores = qh @ kh.T
            for d in range(EDGE_DIM):
                scores = scores + e_dense[d] * jnp.sum(qh * we[d, h], axis=1, keepdims=True)
            scores = scores * (1.0 / float(c) ** 0.5)
            scores = jnp.where(mask > 0.0, scores, NEG_INF)
            m = jnp.max(scores, axis=1, keepdims=True)
            p = jnp.exp(scores - m) * mask
            attn = p / jnp.maximum(jnp.sum(p, axis=1, keepdims=True), 1e-30)
            oh = attn @ vh
            for d in range(EDGE_DIM):
                oh = oh + jnp.sum(attn * e_dense[d], axis=1, keepdims=True) * we[d, h]
            outs.append(oh)
        out = jnp.concatenate(outs, axis=1)
        skip = xin @ wskip + bskip
        beta = jax.nn.sigmoid(jnp.sum(out * wb_out, axis=1, keepdims=True)
                              + jnp.sum(skip * wb_skip, axis=1, keepdims=True))
        return beta * skip + (1.0 - beta) * out

    def gnorm(xin, pr):
        gw, gb, gms = pr
        mean = jnp.mean(xin, axis=0, keepdims=True)
        o = xin - mean * gms
        var = jnp.mean(o * o, axis=0, keepdims=True)
        return gw * o / jnp.sqrt(var + GN_EPS) + gb

    h = tconv(x, params[0:11], C1)
    h = jnp.maximum(gnorm(h, params[11:14]), 0.0)
    h = tconv(h, params[14:25], C2)
    h = jnp.maximum(gnorm(h, params[25:28]), 0.0)
    xt = h.T @ h
    return (xt - jnp.min(xt)) / (jnp.max(xt) - jnp.min(xt) + 1e-8)


# --------------------------------------------- main --------------------------------------------
if __name__ == "__main__":
    key = jax.random.PRNGKey(0)
    k_x, k_e, k_m, k_t, k_p = jax.random.split(key, 5)

    # node features (brain-graph convention: x is the n_source x n_source connectivity rows)
    x = jax.random.normal(k_x, (N_SOURCE, F1), jnp.float32)
    # random directed edge set, self-loops guaranteed (every node has an incoming edge)
    rnd = jax.random.uniform(k_m, (N_SOURCE, N_SOURCE))
    mask = jnp.where(rnd < 0.5, 1.0, 0.0).astype(jnp.float32)
    mask = jnp.maximum(mask, jnp.eye(N_SOURCE, dtype=jnp.float32))
    # dense edge attributes (zero where no edge)
    e_dense = jax.random.normal(k_e, (EDGE_DIM, N_SOURCE, N_SOURCE), jnp.float32) * mask[None]
    target_m = jax.random.normal(k_t, (N_TARGET, N_TARGET), jnp.float32)

    params = init_params(k_p)
    param_slab = pack_params(params)                  # one contiguous [80, 128] f32 slab

    pred_m, tgt = jax.jit(direct_sr_forward)(x, mask, e_dense, param_slab, target_m)
    pred_m = jax.block_until_ready(pred_m)

    ref = reference_forward(x, mask, e_dense, params)
    assert pred_m.shape == (N_TARGET, N_TARGET)
    assert bool(jnp.all(jnp.isfinite(pred_m)))
    max_err = float(jnp.max(jnp.abs(pred_m - ref)))
    assert max_err < 5e-3, f"mismatch vs reference: {max_err}"
    print("KERNEL_OK")
</pallas_src>

<mosaic_0001>
module attributes {stable_mosaic.version = 11 : i64} {
  func.func @direct_sr_kernel(%arg0: memref<80x128xf32, #tpu.memory_space<vmem>>, %arg1: memref<16x128xf32, #tpu.memory_space<vmem>>, %arg2: memref<32x128xf32, #tpu.memory_space<vmem>>) attributes {dimension_semantics = [], scalar_prefetch = 0 : i64, scratch_operands = 0 : i64, tpu.core_type = #tpu.core_type<tc>} {
    %c0 = arith.constant 0 : index
    %c0_0 = arith.constant 0 : index
    %0 = vector.load %arg1[%c0, %c0_0] : memref<16x128xf32, #tpu.memory_space<vmem>>, vector<16x128xf32>
    %1 = vector.extract_strided_slice %0 {offsets = [0, 0], sizes = [16, 16], strides = [1, 1]} : vector<16x128xf32> to vector<16x16xf32>
    %2 = vector.extract_strided_slice %0 {offsets = [0, 16], sizes = [16, 16], strides = [1, 1]} : vector<16x128xf32> to vector<16x16xf32>
    %3 = vector.extract_strided_slice %0 {offsets = [0, 32], sizes = [16, 16], strides = [1, 1]} : vector<16x128xf32> to vector<16x16xf32>
    %4 = vector.extract_strided_slice %0 {offsets = [0, 48], sizes = [16, 16], strides = [1, 1]} : vector<16x128xf32> to vector<16x16xf32>
    %c0_1 = arith.constant 0 : index
    %c0_2 = arith.constant 0 : index
    %5 = vector.load %arg0[%c0_1, %c0_2] : memref<80x128xf32, #tpu.memory_space<vmem>>, vector<16x128xf32>
    %c48 = arith.constant 48 : index
    %c0_3 = arith.constant 0 : index
    %6 = vector.load %arg0[%c48, %c0_3] : memref<80x128xf32, #tpu.memory_space<vmem>>, vector<1x128xf32>
    %cst = arith.constant dense<0.000000e+00> : vector<16x128xf32>
    %7 = tpu.matmul %1, %5, %cst {dimension_numbers = #tpu.dot_dimension_numbers<[1], [0], [0], [1], [0, 0, 1, 1], [], []>} : vector<16x16xf32>, vector<16x128xf32>, vector<16x128xf32> -> vector<16x128xf32>
    %8 = vector.broadcast %6 : vector<1x128xf32> to vector<16x128xf32>
    %9 = arith.addf %7, %8 : vector<16x128xf32>
    %c49 = arith.constant 49 : index
    %c0_4 = arith.constant 0 : index
    %10 = vector.load %arg0[%c49, %c0_4] : memref<80x128xf32, #tpu.memory_space<vmem>>, vector<4x128xf32>
    %cst_5 = arith.constant dense<0.000000e+00> : vector<16x4xf32>
    %11 = tpu.matmul %9, %10, %cst_5 {dimension_numbers = #tpu.dot_dimension_numbers<[1], [1], [0], [0], [0, 0, 1, 0], [], []>} : vector<16x128xf32>, vector<4x128xf32>, vector<16x4xf32> -> vector<16x4xf32>
    %c57 = arith.constant 57 : index
    %c0_6 = arith.constant 0 : index
    %12 = vector.load %arg0[%c57, %c0_6] : memref<80x128xf32, #tpu.memory_space<vmem>>, vector<4x16xf32>
    %13 = vector.extract_strided_slice %9 {offsets = [0, 0], sizes = [16, 16], strides = [1, 1]} : vector<16x128xf32> to vector<16x16xf32>
    %14 = vector.extract_strided_slice %9 {offsets = [0, 32], sizes = [16, 16], strides = [1, 1]} : vector<16x128xf32> to vector<16x16xf32>
    %15 = vector.extract_strided_slice %9 {offsets = [0, 64], sizes = [16, 16], strides = [1, 1]} : vector<16x128xf32> to vector<16x16xf32>
    %cst_7 = arith.constant dense<0.000000e+00> : vector<16x16xf32>
    %16 = tpu.matmul %13, %14, %cst_7 {dimension_numbers = #tpu.dot_dimension_numbers<[1], [1], [0], [0], [0, 0, 1, 0], [], []>} : vector<16x16xf32>, vector<16x16xf32>, vector<16x16xf32> -> vector<16x16xf32>
    %17 = vector.extract_strided_slice %11 {offsets = [0, 0], sizes = [16, 1], strides = [1, 1]} : vector<16x4xf32> to vector<16x1xf32>
    %18 = vector.broadcast %17 : vector<16x1xf32> to vector<16x16xf32>
    %19 = arith.mulf %3, %18 : vector<16x16xf32>
    %20 = arith.addf %16, %19 : vector<16x16xf32>
    %21 = vector.extract_strided_slice %11 {offsets = [0, 2], sizes = [16, 1], strides = [1, 1]} : vector<16x4xf32> to vector<16x1xf32>
    %22 = vector.broadcast %21 : vector<16x1xf32> to vector<16x16xf32>
    %23 = arith.mulf %4, %22 : vector<16x16xf32>
    %24 = arith.addf %20, %23 : vector<16x16xf32>
    %cst_8 = arith.constant 2.500000e-01 : f32
    %25 = vector.broadcast %cst_8 : f32 to vector<16x16xf32>
    %26 = arith.mulf %24, %25 : vector<16x16xf32>
    %27 = arith.addf %26, %2 : vector<16x16xf32>
    %cst_9 = arith.constant dense<0xFF800000> : vector<16xf32>
    %28 = vector.multi_reduction <maximumf>, %27, %cst_9 [1] : vector<16x16xf32> to vector<16xf32>
    %29 = vector.shape_cast %28 : vector<16xf32> to vector<16x1xf32>
    %30 = vector.broadcast %29 : vector<16x1xf32> to vector<16x16xf32>
    %31 = arith.subf %27, %30 : vector<16x16xf32>
    %32 = math.exp %31 : vector<16x16xf32>
    %cst_10 = arith.constant dense<0.000000e+00> : vector<16xf32>
    %33 = vector.multi_reduction <add>, %32, %cst_10 [1] : vector<16x16xf32> to vector<16xf32>
    %34 = vector.shape_cast %33 : vector<16xf32> to vector<16x1xf32>
    %cst_11 = arith.constant 1.000000e-30 : f32
    %35 = vector.broadcast %cst_11 : f32 to vector<16x1xf32>
    %36 = arith.maximumf %34, %35 : vector<16x1xf32>
    %37 = tpu.reciprocal %36 {approx = true} : vector<16x1xf32> -> vector<16x1xf32>
    %38 = arith.mulf %32, %3 : vector<16x16xf32>
    %39 = arith.mulf %32, %4 : vector<16x16xf32>
    %40 = tpu.concatenate %32, %38, %39 in 1 : vector<16x16xf32>, vector<16x16xf32>, vector<16x16xf32> -> vector<16x48xf32>
    %41 = vector.extract_strided_slice %12 {offsets = [0, 0], sizes = [1, 16], strides = [1, 1]} : vector<4x16xf32> to vector<1x16xf32>
    %42 = vector.shape_cast %41 : vector<1x16xf32> to vector<1x16xf32>
    %43 = vector.broadcast %42 : vector<1x16xf32> to vector<16x16xf32>
    %44 = vector.extract_strided_slice %12 {offsets = [2, 0], sizes = [1, 16], strides = [1, 1]} : vector<4x16xf32> to vector<1x16xf32>
    %45 = vector.shape_cast %44 : vector<1x16xf32> to vector<1x16xf32>
    %46 = vector.broadcast %45 : vector<1x16xf32> to vector<16x16xf32>
    %47 = tpu.concatenate %15, %43, %46 in 0 : vector<16x16xf32>, vector<16x16xf32>, vector<16x16xf32> -> vector<48x16xf32>
    %cst_12 = arith.constant dense<0.000000e+00> : vector<16x16xf32>
    %48 = tpu.matmul %40, %47, %cst_12 {dimension_numbers = #tpu.dot_dimension_numbers<[1], [0], [0], [1], [0, 0, 1, 1], [], []>} : vector<16x48xf32>, vector<48x16xf32>, vector<16x16xf32> -> vector<16x16xf32>
    %49 = vector.broadcast %37 : vector<16x1xf32> to vector<16x16xf32>
    %50 = arith.mulf %48, %49 : vector<16x16xf32>
    %51 = vector.extract_strided_slice %9 {offsets = [0, 16], sizes = [16, 16], strides = [1, 1]} : vector<16x128xf32> to vector<16x16xf32>
    %52 = vector.extract_strided_slice %9 {offsets = [0, 48], sizes = [16, 16], strides = [1, 1]} : vector<16x128xf32> to vector<16x16xf32>
    %53 = vector.extract_strided_slice %9 {offsets = [0, 80], sizes = [16, 16], strides = [1, 1]} : vector<16x128xf32> to vector<16x16xf32>
    %cst_13 = arith.constant dense<0.000000e+00> : vector<16x16xf32>
    %54 = tpu.matmul %51, %52, %cst_13 {dimension_numbers = #tpu.dot_dimension_numbers<[1], [1], [0], [0], [0, 0, 1, 0], [], []>} : vector<16x16xf32>, vector<16x16xf32>, vector<16x16xf32> -> vector<16x16xf32>
    %55 = vector.extract_strided_slice %11 {offsets = [0, 1], sizes = [16, 1], strides = [1, 1]} : vector<16x4xf32> to vector<16x1xf32>
    %56 = vector.broadcast %55 : vector<16x1xf32> to vector<16x16xf32>
    %57 = arith.mulf %3, %56 : vector<16x16xf32>
    %58 = arith.addf %54, %57 : vector<16x16xf32>
    %59 = vector.extract_strided_slice %11 {offsets = [0, 3], sizes = [16, 1], strides = [1, 1]} : vector<16x4xf32> to vector<16x1xf32>
    %60 = vector.broadcast %59 : vector<16x1xf32> to vector<16x16xf32>
    %61 = arith.mulf %4, %60 : vector<16x16xf32>
    %62 = arith.addf %58, %61 : vector<16x16xf32>
    %cst_14 = arith.constant 2.500000e-01 : f32
    %63 = vector.broadcast %cst_14 : f32 to vector<16x16xf32>
    %64 = arith.mulf %62, %63 : vector<16x16xf32>
    %65 = arith.addf %64, %2 : vector<16x16xf32>
    %cst_15 = arith.constant dense<0xFF800000> : vector<16xf32>
    %66 = vector.multi_reduction <maximumf>, %65, %cst_15 [1] : vector<16x16xf32> to vector<16xf32>
    %67 = vector.shape_cast %66 : vector<16xf32> to vector<16x1xf32>
    %68 = vector.broadcast %67 : vector<16x1xf32> to vector<16x16xf32>
    %69 = arith.subf %65, %68 : vector<16x16xf32>
    %70 = math.exp %69 : vector<16x16xf32>
    %cst_16 = arith.constant dense<0.000000e+00> : vector<16xf32>
    %71 = vector.multi_reduction <add>, %70, %cst_16 [1] : vector<16x16xf32> to vector<16xf32>
    %72 = vector.shape_cast %71 : vector<16xf32> to vector<16x1xf32>
    %cst_17 = arith.constant 1.000000e-30 : f32
    %73 = vector.broadcast %cst_17 : f32 to vector<16x1xf32>
    %74 = arith.maximumf %72, %73 : vector<16x1xf32>
    %75 = tpu.reciprocal %74 {approx = true} : vector<16x1xf32> -> vector<16x1xf32>
    %76 = arith.mulf %70, %3 : vector<16x16xf32>
    %77 = arith.mulf %70, %4 : vector<16x16xf32>
    %78 = tpu.concatenate %70, %76, %77 in 1 : vector<16x16xf32>, vector<16x16xf32>, vector<16x16xf32> -> vector<16x48xf32>
    %79 = vector.extract_strided_slice %12 {offsets = [1, 0], sizes = [1, 16], strides = [1, 1]} : vector<4x16xf32> to vector<1x16xf32>
    %80 = vector.shape_cast %79 : vector<1x16xf32> to vector<1x16xf32>
    %81 = vector.broadcast %80 : vector<1x16xf32> to vector<16x16xf32>
    %82 = vector.extract_strided_slice %12 {offsets = [3, 0], sizes = [1, 16], strides = [1, 1]} : vector<4x16xf32> to vector<1x16xf32>
    %83 = vector.shape_cast %82 : vector<1x16xf32> to vector<1x16xf32>
    %84 = vector.broadcast %83 : vector<1x16xf32> to vector<16x16xf32>
    %85 = tpu.concatenate %53, %81, %84 in 0 : vector<16x16xf32>, vector<16x16xf32>, vector<16x16xf32> -> vector<48x16xf32>
    %cst_18 = arith.constant dense<0.000000e+00> : vector<16x16xf32>
    %86 = tpu.matmul %78, %85, %cst_18 {dimension_numbers = #tpu.dot_dimension_numbers<[1], [0], [0], [1], [0, 0, 1, 1], [], []>} : vector<16x48xf32>, vector<48x16xf32>, vector<16x16xf32> -> vector<16x16xf32>
    %87 = vector.broadcast %75 : vector<16x1xf32> to vector<16x16xf32>
    %88 = arith.mulf %86, %87 : vector<16x16xf32>
    %89 = tpu.concatenate %50, %88 in 1 : vector<16x16xf32>, vector<16x16xf32> -> vector<16x32xf32>
    %90 = vector.extract_strided_slice %9 {offsets = [0, 96], sizes = [16, 32], strides = [1, 1]} : vector<16x128xf32> to vector<16x32xf32>
    %c56 = arith.constant 56 : index
    %c0_19 = arith.constant 0 : index
    %91 = vector.load %arg0[%c56, %c0_19] : memref<80x128xf32, #tpu.memory_space<vmem>>, vector<1x64xf32>
    %92 = tpu.concatenate %89, %90 in 1 : vector<16x32xf32>, vector<16x32xf32> -> vector<16x64xf32>
    %cst_20 = arith.constant dense<0.000000e+00> : vector<16x1xf32>
    %93 = tpu.matmul %92, %91, %cst_20 {dimension_numbers = #tpu.dot_dimension_numbers<[1], [1], [0], [0], [0, 0, 1, 0], [], []>} : vector<16x64xf32>, vector<1x64xf32>, vector<16x1xf32> -> vector<16x1xf32>
    %94 = arith.negf %93 : vector<16x1xf32>
    %95 = math.exp %94 : vector<16x1xf32>
    %cst_21 = arith.constant 1.000000e+00 : f32
    %96 = vector.broadcast %cst_21 : f32 to vector<16x1xf32>
    %97 = arith.addf %96, %95 : vector<16x1xf32>
    %98 = arith.divf %96, %97 : vector<16x1xf32>
    %99 = vector.broadcast %98 : vector<16x1xf32> to vector<16x32xf32>
    %100 = arith.mulf %99, %90 : vector<16x32xf32>
    %cst_22 = arith.constant 1.000000e+00 : f32
    %101 = vector.broadcast %cst_22 : f32 to vector<16x1xf32>
    %102 = arith.subf %101, %98 : vector<16x1xf32>
    %103 = vector.broadcast %102 : vector<16x1xf32> to vector<16x32xf32>
    %104 = arith.mulf %103, %89 : vector<16x32xf32>
    %105 = arith.addf %100, %104 : vector<16x32xf32>
    %c53 = arith.constant 53 : index
    %c0_23 = arith.constant 0 : index
    %106 = vector.load %arg0[%c53, %c0_23] : memref<80x128xf32, #tpu.memory_space<vmem>>, vector<1x32xf32>
    %c54 = arith.constant 54 : index
    %c0_24 = arith.constant 0 : index
    %107 = vector.load %arg0[%c54, %c0_24] : memref<80x128xf32, #tpu.memory_space<vmem>>, vector<1x32xf32>
    %c55 = arith.constant 55 : index
    %c0_25 = arith.constant 0 : index
    %108 = vector.load %arg0[%c55, %c0_25] : memref<80x128xf32, #tpu.memory_space<vmem>>, vector<1x32xf32>
    %cst_26 = arith.constant dense<0.000000e+00> : vector<32xf32>
    %109 = vector.multi_reduction <add>, %105, %cst_26 [0] : vector<16x32xf32> to vector<32xf32>
    %110 = vector.shape_cast %109 : vector<32xf32> to vector<1x32xf32>
    %cst_27 = arith.constant 1.600000e+01 : f32
    %111 = vector.broadcast %cst_27 : f32 to vector<1x32xf32>
    %112 = arith.divf %110, %111 : vector<1x32xf32>
    %113 = arith.mulf %112, %108 : vector<1x32xf32>
    %114 = vector.broadcast %113 : vector<1x32xf32> to vector<16x32xf32>
    %115 = arith.subf %105, %114 : vector<16x32xf32>
    %116 = arith.mulf %115, %115 : vector<16x32xf32>
    %cst_28 = arith.constant dense<0.000000e+00> : vector<32xf32>
    %117 = vector.multi_reduction <add>, %116, %cst_28 [0] : vector<16x32xf32> to vector<32xf32>
    %118 = vector.shape_cast %117 : vector<32xf32> to vector<1x32xf32>
    %cst_29 = arith.constant 1.600000e+01 : f32
    %119 = vector.broadcast %cst_29 : f32 to vector<1x32xf32>
    %120 = arith.divf %118, %119 : vector<1x32xf32>
    %121 = vector.broadcast %106 : vector<1x32xf32> to vector<16x32xf32>
    %122 = arith.mulf %121, %115 : vector<16x32xf32>
    %cst_30 = arith.constant 9.99999974E-6 : f32
    %123 = vector.broadcast %cst_30 : f32 to vector<1x32xf32>
    %124 = arith.addf %120, %123 : vector<1x32xf32>
    %125 = math.rsqrt %124 : vector<1x32xf32>
    %126 = vector.broadcast %125 : vector<1x32xf32> to vector<16x32xf32>
    %127 = arith.mulf %122, %126 : vector<16x32xf32>
    %128 = vector.broadcast %107 : vector<1x32xf32> to vector<16x32xf32>
    %129 = arith.addf %127, %128 : vector<16x32xf32>
    %cst_31 = arith.constant 0.000000e+00 : f32
    %130 = vector.broadcast %cst_31 : f32 to vector<16x32xf32>
    %131 = arith.maximumf %129, %130 : vector<16x32xf32>
    %c16 = arith.constant 16 : index
    %c0_32 = arith.constant 0 : index
    %132 = vector.load %arg0[%c16, %c0_32] : memref<80x128xf32, #tpu.memory_space<vmem>>, vector<32x128xf32>
    %c64 = arith.constant 64 : index
    %c0_33 = arith.constant 0 : index
    %133 = vector.load %arg0[%c64, %c0_33] : memref<80x128xf32, #tpu.memory_space<vmem>>, vector<1x128xf32>
    %cst_34 = arith.constant dense<0.000000e+00> : vector<16x128xf32>
    %134 = tpu.matmul %131, %132, %cst_34 {dimension_numbers = #tpu.dot_dimension_numbers<[1], [0], [0], [1], [0, 0, 1, 1], [], []>} : vector<16x32xf32>, vector<32x128xf32>, vector<16x128xf32> -> vector<16x128xf32>
    %135 = vector.broadcast %133 : vector<1x128xf32> to vector<16x128xf32>
    %136 = arith.addf %134, %135 : vector<16x128xf32>
    %c65 = arith.constant 65 : index
    %c0_35 = arith.constant 0 : index
    %137 = vector.load %arg0[%c65, %c0_35] : memref<80x128xf32, #tpu.memory_space<vmem>>, vector<4x128xf32>
    %cst_36 = arith.constant dense<0.000000e+00> : vector<16x4xf32>
    %138 = tpu.matmul %136, %137, %cst_36 {dimension_numbers = #tpu.dot_dimension_numbers<[1], [1], [0], [0], [0, 0, 1, 0], [], []>} : vector<16x128xf32>, vector<4x128xf32>, vector<16x4xf32> -> vector<16x4xf32>
    %c73 = arith.constant 73 : index
    %c0_37 = arith.constant 0 : index
    %139 = vector.load %arg0[%c73, %c0_37] : memref<80x128xf32, #tpu.memory_space<vmem>>, vector<4x16xf32>
    %140 = vector.extract_strided_slice %136 {offsets = [0, 0], sizes = [16, 16], strides = [1, 1]} : vector<16x128xf32> to vector<16x16xf32>
    %141 = vector.extract_strided_slice %136 {offsets = [0, 32], sizes = [16, 16], strides = [1, 1]} : vector<16x128xf32> to vector<16x16xf32>
    %142 = vector.extract_strided_slice %136 {offsets = [0, 64], sizes = [16, 16], strides = [1, 1]} : vector<16x128xf32> to vector<16x16xf32>
    %cst_38 = arith.constant dense<0.000000e+00> : vector<16x16xf32>
    %143 = tpu.matmul %140, %141, %cst_38 {dimension_numbers = #tpu.dot_dimension_numbers<[1], [1], [0], [0], [0, 0, 1, 0], [], []>} : vector<16x16xf32>, vector<16x16xf32>, vector<16x16xf32> -> vector<16x16xf32>
    %144 = vector.extract_strided_slice %138 {offsets = [0, 0], sizes = [16, 1], strides = [1, 1]} : vector<16x4xf32> to vector<16x1xf32>
    %145 = vector.broadcast %144 : vector<16x1xf32> to vector<16x16xf32>
    %146 = arith.mulf %3, %145 : vector<16x16xf32>
    %147 = arith.addf %143, %146 : vector<16x16xf32>
    %148 = vector.extract_strided_slice %138 {offsets = [0, 2], sizes = [16, 1], strides = [1, 1]} : vector<16x4xf32> to vector<16x1xf32>
    %149 = vector.broadcast %148 : vector<16x1xf32> to vector<16x16xf32>
    %150 = arith.mulf %4, %149 : vector<16x16xf32>
    %151 = arith.addf %147, %150 : vector<16x16xf32>
    %cst_39 = arith.constant 2.500000e-01 : f32
    %152 = vector.broadcast %cst_39 : f32 to vector<16x16xf32>
    %153 = arith.mulf %151, %152 : vector<16x16xf32>
    %154 = arith.addf %153, %2 : vector<16x16xf32>
    %cst_40 = arith.constant dense<0xFF800000> : vector<16xf32>
    %155 = vector.multi_reduction <maximumf>, %154, %cst_40 [1] : vector<16x16xf32> to vector<16xf32>
    %156 = vector.shape_cast %155 : vector<16xf32> to vector<16x1xf32>
    %157 = vector.broadcast %156 : vector<16x1xf32> to vector<16x16xf32>
    %158 = arith.subf %154, %157 : vector<16x16xf32>
    %159 = math.exp %158 : vector<16x16xf32>
    %cst_41 = arith.constant dense<0.000000e+00> : vector<16xf32>
    %160 = vector.multi_reduction <add>, %159, %cst_41 [1] : vector<16x16xf32> to vector<16xf32>
    %161 = vector.shape_cast %160 : vector<16xf32> to vector<16x1xf32>
    %cst_42 = arith.constant 1.000000e-30 : f32
    %162 = vector.broadcast %cst_42 : f32 to vector<16x1xf32>
    %163 = arith.maximumf %161, %162 : vector<16x1xf32>
    %164 = tpu.reciprocal %163 {approx = true} : vector<16x1xf32> -> vector<16x1xf32>
    %165 = arith.mulf %159, %3 : vector<16x16xf32>
    %166 = arith.mulf %159, %4 : vector<16x16xf32>
    %167 = tpu.concatenate %159, %165, %166 in 1 : vector<16x16xf32>, vector<16x16xf32>, vector<16x16xf32> -> vector<16x48xf32>
    %168 = vector.extract_strided_slice %139 {offsets = [0, 0], sizes = [1, 16], strides = [1, 1]} : vector<4x16xf32> to vector<1x16xf32>
    %169 = vector.shape_cast %168 : vector<1x16xf32> to vector<1x16xf32>
    %170 = vector.broadcast %169 : vector<1x16xf32> to vector<16x16xf32>
    %171 = vector.extract_strided_slice %139 {offsets = [2, 0], sizes = [1, 16], strides = [1, 1]} : vector<4x16xf32> to vector<1x16xf32>
    %172 = vector.shape_cast %171 : vector<1x16xf32> to vector<1x16xf32>
    %173 = vector.broadcast %172 : vector<1x16xf32> to vector<16x16xf32>
    %174 = tpu.concatenate %142, %170, %173 in 0 : vector<16x16xf32>, vector<16x16xf32>, vector<16x16xf32> -> vector<48x16xf32>
    %cst_43 = arith.constant dense<0.000000e+00> : vector<16x16xf32>
    %175 = tpu.matmul %167, %174, %cst_43 {dimension_numbers = #tpu.dot_dimension_numbers<[1], [0], [0], [1], [0, 0, 1, 1], [], []>} : vector<16x48xf32>, vector<48x16xf32>, vector<16x16xf32> -> vector<16x16xf32>
    %176 = vector.broadcast %164 : vector<16x1xf32> to vector<16x16xf32>
    %177 = arith.mulf %175, %176 : vector<16x16xf32>
    %178 = vector.extract_strided_slice %136 {offsets = [0, 16], sizes = [16, 16], strides = [1, 1]} : vector<16x128xf32> to vector<16x16xf32>
    %179 = vector.extract_strided_slice %136 {offsets = [0, 48], sizes = [16, 16], strides = [1, 1]} : vector<16x128xf32> to vector<16x16xf32>
    %180 = vector.extract_strided_slice %136 {offsets = [0, 80], sizes = [16, 16], strides = [1, 1]} : vector<16x128xf32> to vector<16x16xf32>
    %cst_44 = arith.constant dense<0.000000e+00> : vector<16x16xf32>
    %181 = tpu.matmul %178, %179, %cst_44 {dimension_numbers = #tpu.dot_dimension_numbers<[1], [1], [0], [0], [0, 0, 1, 0], [], []>} : vector<16x16xf32>, vector<16x16xf32>, vector<16x16xf32> -> vector<16x16xf32>
    %182 = vector.extract_strided_slice %138 {offsets = [0, 1], sizes = [16, 1], strides = [1, 1]} : vector<16x4xf32> to vector<16x1xf32>
    %183 = vector.broadcast %182 : vector<16x1xf32> to vector<16x16xf32>
    %184 = arith.mulf %3, %183 : vector<16x16xf32>
    %185 = arith.addf %181, %184 : vector<16x16xf32>
    %186 = vector.extract_strided_slice %138 {offsets = [0, 3], sizes = [16, 1], strides = [1, 1]} : vector<16x4xf32> to vector<16x1xf32>
    %187 = vector.broadcast %186 : vector<16x1xf32> to vector<16x16xf32>
    %188 = arith.mulf %4, %187 : vector<16x16xf32>
    %189 = arith.addf %185, %188 : vector<16x16xf32>
    %cst_45 = arith.constant 2.500000e-01 : f32
    %190 = vector.broadcast %cst_45 : f32 to vector<16x16xf32>
    %191 = arith.mulf %189, %190 : vector<16x16xf32>
    %192 = arith.addf %191, %2 : vector<16x16xf32>
    %cst_46 = arith.constant dense<0xFF800000> : vector<16xf32>
    %193 = vector.multi_reduction <maximumf>, %192, %cst_46 [1] : vector<16x16xf32> to vector<16xf32>
    %194 = vector.shape_cast %193 : vector<16xf32> to vector<16x1xf32>
    %195 = vector.broadcast %194 : vector<16x1xf32> to vector<16x16xf32>
    %196 = arith.subf %192, %195 : vector<16x16xf32>
    %197 = math.exp %196 : vector<16x16xf32>
    %cst_47 = arith.constant dense<0.000000e+00> : vector<16xf32>
    %198 = vector.multi_reduction <add>, %197, %cst_47 [1] : vector<16x16xf32> to vector<16xf32>
    %199 = vector.shape_cast %198 : vector<16xf32> to vector<16x1xf32>
    %cst_48 = arith.constant 1.000000e-30 : f32
    %200 = vector.broadcast %cst_48 : f32 to vector<16x1xf32>
    %201 = arith.maximumf %199, %200 : vector<16x1xf32>
    %202 = tpu.reciprocal %201 {approx = true} : vector<16x1xf32> -> vector<16x1xf32>
    %203 = arith.mulf %197, %3 : vector<16x16xf32>
    %204 = arith.mulf %197, %4 : vector<16x16xf32>
    %205 = tpu.concatenate %197, %203, %204 in 1 : vector<16x16xf32>, vector<16x16xf32>, vector<16x16xf32> -> vector<16x48xf32>
    %206 = vector.extract_strided_slice %139 {offsets = [1, 0], sizes = [1, 16], strides = [1, 1]} : vector<4x16xf32> to vector<1x16xf32>
    %207 = vector.shape_cast %206 : vector<1x16xf32> to vector<1x16xf32>
    %208 = vector.broadcast %207 : vector<1x16xf32> to vector<16x16xf32>
    %209 = vector.extract_strided_slice %139 {offsets = [3, 0], sizes = [1, 16], strides = [1, 1]} : vector<4x16xf32> to vector<1x16xf32>
    %210 = vector.shape_cast %209 : vector<1x16xf32> to vector<1x16xf32>
    %211 = vector.broadcast %210 : vector<1x16xf32> to vector<16x16xf32>
    %212 = tpu.concatenate %180, %208, %211 in 0 : vector<16x16xf32>, vector<16x16xf32>, vector<16x16xf32> -> vector<48x16xf32>
    %cst_49 = arith.constant dense<0.000000e+00> : vector<16x16xf32>
    %213 = tpu.matmul %205, %212, %cst_49 {dimension_numbers = #tpu.dot_dimension_numbers<[1], [0], [0], [1], [0, 0, 1, 1], [], []>} : vector<16x48xf32>, vector<48x16xf32>, vector<16x16xf32> -> vector<16x16xf32>
    %214 = vector.broadcast %202 : vector<16x1xf32> to vector<16x16xf32>
    %215 = arith.mulf %213, %214 : vector<16x16xf32>
    %216 = tpu.concatenate %177, %215 in 1 : vector<16x16xf32>, vector<16x16xf32> -> vector<16x32xf32>
    %217 = vector.extract_strided_slice %136 {offsets = [0, 96], sizes = [16, 32], strides = [1, 1]} : vector<16x128xf32> to vector<16x32xf32>
    %c72 = arith.constant 72 : index
    %c0_50 = arith.constant 0 : index
    %218 = vector.load %arg0[%c72, %c0_50] : memref<80x128xf32, #tpu.memory_space<vmem>>, vector<1x64xf32>
    %219 = tpu.concatenate %216, %217 in 1 : vector<16x32xf32>, vector<16x32xf32> -> vector<16x64xf32>
    %cst_51 = arith.constant dense<0.000000e+00> : vector<16x1xf32>
    %220 = tpu.matmul %219, %218, %cst_51 {dimension_numbers = #tpu.dot_dimension_numbers<[1], [1], [0], [0], [0, 0, 1, 0], [], []>} : vector<16x64xf32>, vector<1x64xf32>, vector<16x1xf32> -> vector<16x1xf32>
    %221 = arith.negf %220 : vector<16x1xf32>
    %222 = math.exp %221 : vector<16x1xf32>
    %cst_52 = arith.constant 1.000000e+00 : f32
    %223 = vector.broadcast %cst_52 : f32 to vector<16x1xf32>
    %224 = arith.addf %223, %222 : vector<16x1xf32>
    %225 = arith.divf %223, %224 : vector<16x1xf32>
    %226 = vector.broadcast %225 : vector<16x1xf32> to vector<16x32xf32>
    %227 = arith.mulf %226, %217 : vector<16x32xf32>
    %cst_53 = arith.constant 1.000000e+00 : f32
    %228 = vector.broadcast %cst_53 : f32 to vector<16x1xf32>
    %229 = arith.subf %228, %225 : vector<16x1xf32>
    %230 = vector.broadcast %229 : vector<16x1xf32> to vector<16x32xf32>
    %231 = arith.mulf %230, %216 : vector<16x32xf32>
    %232 = arith.addf %227, %231 : vector<16x32xf32>
    %c69 = arith.constant 69 : index
    %c0_54 = arith.constant 0 : index
    %233 = vector.load %arg0[%c69, %c0_54] : memref<80x128xf32, #tpu.memory_space<vmem>>, vector<1x32xf32>
    %c70 = arith.constant 70 : index
    %c0_55 = arith.constant 0 : index
    %234 = vector.load %arg0[%c70, %c0_55] : memref<80x128xf32, #tpu.memory_space<vmem>>, vector<1x32xf32>
    %c71 = arith.constant 71 : index
    %c0_56 = arith.constant 0 : index
    %235 = vector.load %arg0[%c71, %c0_56] : memref<80x128xf32, #tpu.memory_space<vmem>>, vector<1x32xf32>
    %cst_57 = arith.constant dense<0.000000e+00> : vector<32xf32>
    %236 = vector.multi_reduction <add>, %232, %cst_57 [0] : vector<16x32xf32> to vector<32xf32>
    %237 = vector.shape_cast %236 : vector<32xf32> to vector<1x32xf32>
    %cst_58 = arith.constant 1.600000e+01 : f32
    %238 = vector.broadcast %cst_58 : f32 to vector<1x32xf32>
    %239 = arith.divf %237, %238 : vector<1x32xf32>
    %240 = arith.mulf %239, %235 : vector<1x32xf32>
    %241 = vector.broadcast %240 : vector<1x32xf32> to vector<16x32xf32>
    %242 = arith.subf %232, %241 : vector<16x32xf32>
    %243 = arith.mulf %242, %242 : vector<16x32xf32>
    %cst_59 = arith.constant dense<0.000000e+00> : vector<32xf32>
    %244 = vector.multi_reduction <add>, %243, %cst_59 [0] : vector<16x32xf32> to vector<32xf32>
    %245 = vector.shape_cast %244 : vector<32xf32> to vector<1x32xf32>
    %cst_60 = arith.constant 1.600000e+01 : f32
    %246 = vector.broadcast %cst_60 : f32 to vector<1x32xf32>
    %247 = arith.divf %245, %246 : vector<1x32xf32>
    %248 = vector.broadcast %233 : vector<1x32xf32> to vector<16x32xf32>
    %249 = arith.mulf %248, %242 : vector<16x32xf32>
    %cst_61 = arith.constant 9.99999974E-6 : f32
    %250 = vector.broadcast %cst_61 : f32 to vector<1x32xf32>
    %251 = arith.addf %247, %250 : vector<1x32xf32>
    %252 = math.rsqrt %251 : vector<1x32xf32>
    %253 = vector.broadcast %252 : vector<1x32xf32> to vector<16x32xf32>
    %254 = arith.mulf %249, %253 : vector<16x32xf32>
    %255 = vector.broadcast %234 : vector<1x32xf32> to vector<16x32xf32>
    %256 = arith.addf %254, %255 : vector<16x32xf32>
    %cst_62 = arith.constant 0.000000e+00 : f32
    %257 = vector.broadcast %cst_62 : f32 to vector<16x32xf32>
    %258 = arith.maximumf %256, %257 : vector<16x32xf32>
    %cst_63 = arith.constant dense<0.000000e+00> : vector<32x32xf32>
    %259 = tpu.matmul %258, %258, %cst_63 {dimension_numbers = #tpu.dot_dimension_numbers<[0], [0], [1], [1], [0, 1, 1, 1], [], []>} : vector<16x32xf32>, vector<16x32xf32>, vector<32x32xf32> -> vector<32x32xf32>
    %cst_64 = arith.constant dense<0x7F800000> : vector<32xf32>
    %260 = vector.multi_reduction <minimumf>, %259, %cst_64 [1] : vector<32x32xf32> to vector<32xf32>
    %261 = vector.shape_cast %260 : vector<32xf32> to vector<32x1xf32>
    %cst_65 = arith.constant dense<0x7F800000> : vector<1xf32>
    %262 = vector.multi_reduction <minimumf>, %261, %cst_65 [0] : vector<32x1xf32> to vector<1xf32>
    %263 = vector.shape_cast %262 : vector<1xf32> to vector<1x1xf32>
    %cst_66 = arith.constant dense<0xFF800000> : vector<32xf32>
    %264 = vector.multi_reduction <maximumf>, %259, %cst_66 [1] : vector<32x32xf32> to vector<32xf32>
    %265 = vector.shape_cast %264 : vector<32xf32> to vector<32x1xf32>
    %cst_67 = arith.constant dense<0xFF800000> : vector<1xf32>
    %266 = vector.multi_reduction <maximumf>, %265, %cst_67 [0] : vector<32x1xf32> to vector<1xf32>
    %267 = vector.shape_cast %266 : vector<1xf32> to vector<1x1xf32>
    %268 = arith.subf %267, %263 : vector<1x1xf32>
    %cst_68 = arith.constant 9.99999993E-9 : f32
    %269 = vector.broadcast %cst_68 : f32 to vector<1x1xf32>
    %270 = arith.addf %268, %269 : vector<1x1xf32>
    %271 = tpu.reciprocal %270 {approx = true} : vector<1x1xf32> -> vector<1x1xf32>
    %272 = vector.broadcast %263 : vector<1x1xf32> to vector<32x32xf32>
    %273 = arith.subf %259, %272 : vector<32x32xf32>
    %274 = vector.broadcast %271 : vector<1x1xf32> to vector<32x32xf32>
    %275 = arith.mulf %273, %274 : vector<32x32xf32>
    %cst_69 = arith.constant 0.000000e+00 : f32
    %276 = vector.broadcast %cst_69 : f32 to vector<32x96xf32>
    %277 = tpu.concatenate %275, %276 in 1 : vector<32x32xf32>, vector<32x96xf32> -> vector<32x128xf32>
    %c0_70 = arith.constant 0 : index
    %c0_71 = arith.constant 0 : index
    %278 = vector.load %arg2[%c0_70, %c0_71] : memref<32x128xf32, #tpu.memory_space<vmem>>, vector<32x128xf32>
    tpu.vector_store %arg2[%c0_70, %c0_71], %277 {strides = array<i32>} : memref<32x128xf32, #tpu.memory_space<vmem>>, vector<32x128xf32>,
    return
  }
}

</mosaic_0001>

<llo_original>
// kernel: direct_sr_forward.1
$region0: #{direct_sr_forward.1}
  #allocation0 [shape = 'u32[]', space=smem, size = 0x4, offset = 0x4, fixed_abs, tag = 'smem constant byte address 0x4 - core index']
  #allocation1 [shape = 'u32[144,128]{1,0:T(1,128)}', space=vmem, size = 0x12000, scoped, tag = 'internal scratch']
  %s0 = inlined_call_operand.vmem [shape: f32[80,128], index: 0, kind: input, shape index: {}]
  %s1 = inlined_call_operand.vmem [shape: f32[16,128], index: 1, kind: input, shape index: {}]
  %s2 = inlined_call_operand.hbm [shape: f32[32,128], index: 2, kind: output, shape index: {}]
  %s3 = sld [smem:[#allocation0]]
  $region18: #{direct_sr_forward.1} parent=0
    _
  %s5 = ssub.s32 1, %s3
  %s6 = scalar_select 0, %s5, %s3
  $region1: #{direct_sr_forward.1} parent=0
    #allocation2 [shape = 'u8[16384]{0}', space=vmem, size = 0x4000, scoped, tag = 'output window, operand 0, single buffered']
    #allocation3 [shape = 's32[1]{0}', space=sflag, size = 0x4, scoped, tag = 'scoped memory for direct_sr_forward.1']
    %7 = vsyncpa [#allocation3], 0
    // Predicated region
    $region2: #{direct_sr_forward.1} parent=1 // pred_check
      _
    $region3: #{direct_sr_forward.1} parent=1 // pred_check_branch
      %9 = sbr.rel (0) target = $region5
    $region4: #{direct_sr_forward.1} parent=1 // pred_region
      _
    $region5: #{direct_sr_forward.1} parent=1 // pred_fallthru
      _
    // Predicated region
    $region6: #{direct_sr_forward.1} parent=1 // pred_check
      _
    $region7: #{direct_sr_forward.1} parent=1 // pred_check_branch
      %11 = sbr.rel (0) target = $region9
    $region8: #{direct_sr_forward.1} parent=1 // pred_region
      _
    $region9: #{direct_sr_forward.1} parent=1 // pred_fallthru
      _
    %v12 = vld [vmem:[%s1] sm:$0xff]
    %v13 = vld [vmem:[%s1 + $0x8] sm:$0xff]
    %v14 = vld [vmem:[%s0] sm:$0xff]
    %v15 = vld [vmem:[%s0 + $0x8] sm:$0xff]
    %v16 = vld [vmem:[%s0 + $0x30] sm:$0x1]
    %v17 = vlaneseq
    %v18 = vshrl.u32 %v17, 7
    %v19 = vsub.s32 0, %v18
    %v20 = vrot.slane %v16, %v19
    %vm21 = vcmask 130048
    %v23 = vsel %vm21, %v12, 0
    %v26 = vsel %vm21, %v13, 0
    %28 = vmatprep.subr.mxu0 0.0
    %29 = vmatpush1.msra.mxu0 %v14
    %30 = vmatprep.subr.mxu0 0.0
    %31 = vmatpush1.msra.mxu0 %v15
    %32 = vmatprep.subr.mxu0 0.0
    %33 = vmatpush1.msra.mxu0 0.0
    %34 = vmatprep.subr.mxu0 0.0
    %35 = vmatpush1.msra.mxu0 0.0
    %36 = vmatprep.subr.mxu0 0.0
    %37 = vmatpush1.msra.mxu0 0.0
    %38 = vmatprep.subr.mxu0 0.0
    %39 = vmatpush1.msra.mxu0 0.0
    %40 = vmatprep.subr.mxu0 0.0
    %41 = vmatpush1.msra.mxu0 0.0
    %42 = vmatprep.subr.mxu0 0.0
    %43 = vmatpush1.msra.mxu0 0.0
    %44 = vmatprep.subr.mxu0 0.0
    %45 = vmatpush1.msra.mxu0 0.0
    %46 = vmatprep.subr.mxu0 0.0
    %47 = vmatpush1.msra.mxu0 0.0
    %48 = vmatprep.subr.mxu0 0.0
    %49 = vmatpush1.msra.mxu0 0.0
    %50 = vmatprep.subr.mxu0 0.0
    %51 = vmatpush1.msra.mxu0 0.0
    %52 = vmatprep.subr.mxu0 0.0
    %53 = vmatpush1.msra.mxu0 0.0
    %54 = vmatprep.subr.mxu0 0.0
    %55 = vmatpush1.msra.mxu0 0.0
    %56 = vmatprep.subr.mxu0 0.0
    %57 = vmatpush1.msra.mxu0 0.0
    %58 = vmatprep.subr.mxu0 0.0
    %59 = vmatpush1.msra.mxu0 0.0
    %60 = vmatprep.subr.mxu0 0.0
    %61 = vmatpush1.msra.mxu0 0.0
    %62 = vmatprep.subr.mxu0 0.0
    %63 = vmatpush1.msra.mxu0 0.0
    %64 = vmatprep.subr.mxu0 0.0
    %65 = vmatpush1.msra.mxu0 0.0
    %66 = vmatprep.subr.mxu0 0.0
    %67 = vmatpush1.msra.mxu0 0.0
    %68 = vmatprep.subr.mxu0 0.0
    %69 = vmatpush1.msra.mxu0 0.0
    %70 = vmatprep.subr.mxu0 0.0
    %71 = vmatpush1.msra.mxu0 0.0
    %72 = vmatprep.subr.mxu0 0.0
    %73 = vmatpush1.msra.mxu0 0.0
    %74 = vmatprep.subr.mxu0 0.0
    %75 = vmatpush1.msra.mxu0 0.0
    %76 = vmatprep.subr.mxu0 0.0
    %77 = vmatpush1.msra.mxu0 0.0
    %78 = vmatprep.subr.mxu0 0.0
    %79 = vmatpush1.msra.mxu0 0.0
    %80 = vmatprep.subr.mxu0 0.0
    %81 = vmatpush1.msra.mxu0 0.0
    %82 = vmatprep.subr.mxu0 0.0
    %83 = vmatpush1.msra.mxu0 0.0
    %84 = vmatprep.subr.mxu0 0.0
    %85 = vmatpush1.msra.mxu0 0.0
    %86 = vmatprep.subr.mxu0 0.0
    %87 = vmatpush1.msra.mxu0 0.0
    %88 = vmatprep.subr.mxu0 0.0
    %89 = vmatpush1.msra.mxu0 0.0
    %90 = vmatprep.subr.mxu0 0.0
    %91 = vmatpush1.msra.mxu0 0.0
    %92 = vmatprep.mubr.f32.mxu0 0.0
    %93 = vmatmul.mubr.f32.gmra.mrb[0].mxu0 %v23
    %v94 = vpop.f32.mrb[0].mxu0
    %v95 = vadd.f32 %v20, %v94
    %v96 = vpop.f32.mrb[0].mxu0
    %97 = vmatprep.mubr.f32.mxu0 0.0
    %98 = vmatmul.mubr.f32.gmra.mrb[0].mxu0 %v26
    %v99 = vpop.f32.mrb[0].mxu0
    %v100 = vadd.f32 %v20, %v99
    %v101 = vpop.f32.mrb[0].mxu0
    %102 = vdwg.mxu0
    %v103 = vld [vmem:[%s0 + $0x31] sm:$0xf]
    %104 = vmatprep.subr.mxu0 0.0
    %105 = vmatpush1.xpose.msra.mxu0 %v103
    %106 = vmatprep.subr.mxu0 0.0
    %107 = vmatpush1.xpose.msra.mxu0 0.0
    %108 = vmatprep.subr.mxu0 0.0
    %109 = vmatpush1.xpose.msra.mxu0 0.0
    %110 = vmatprep.subr.mxu0 0.0
    %111 = vmatpush1.xpose.msra.mxu0 0.0
    %112 = vmatprep.subr.mxu0 0.0
    %113 = vmatpush1.xpose.msra.mxu0 0.0
    %114 = vmatprep.subr.mxu0 0.0
    %115 = vmatpush1.xpose.msra.mxu0 0.0
    %116 = vmatprep.subr.mxu0 0.0
    %117 = vmatpush1.xpose.msra.mxu0 0.0
    %118 = vmatprep.subr.mxu0 0.0
    %119 = vmatpush1.xpose.msra.mxu0 0.0
    %120 = vmatprep.subr.mxu0 0.0
    %121 = vmatpush1.xpose.msra.mxu0 0.0
    %122 = vmatprep.subr.mxu0 0.0
    %123 = vmatpush1.xpose.msra.mxu0 0.0
    %124 = vmatprep.subr.mxu0 0.0
    %125 = vmatpush1.xpose.msra.mxu0 0.0
    %126 = vmatprep.subr.mxu0 0.0
    %127 = vmatpush1.xpose.msra.mxu0 0.0
    %128 = vmatprep.subr.mxu0 0.0
    %129 = vmatpush1.xpose.msra.mxu0 0.0
    %130 = vmatprep.subr.mxu0 0.0
    %131 = vmatpush1.xpose.msra.mxu0 0.0
    %132 = vmatprep.subr.mxu0 0.0
    %133 = vmatpush1.xpose.msra.mxu0 0.0
    %134 = vmatprep.subr.mxu0 0.0
    %135 = vmatpush1.xpose.msra.mxu0 0.0
    %136 = vmatprep.subr.mxu0 0.0
    %137 = vmatpush1.xpose.msra.mxu0 0.0
    %138 = vmatprep.subr.mxu0 0.0
    %139 = vmatpush1.xpose.msra.mxu0 0.0
    %140 = vmatprep.subr.mxu0 0.0
    %141 = vmatpush1.xpose.msra.mxu0 0.0
    %142 = vmatprep.subr.mxu0 0.0
    %143 = vmatpush1.xpose.msra.mxu0 0.0
    %144 = vmatprep.subr.mxu0 0.0
    %145 = vmatpush1.xpose.msra.mxu0 0.0
    %146 = vmatprep.subr.mxu0 0.0
    %147 = vmatpush1.xpose.msra.mxu0 0.0
    %148 = vmatprep.subr.mxu0 0.0
    %149 = vmatpush1.xpose.msra.mxu0 0.0
    %150 = vmatprep.subr.mxu0 0.0
    %151 = vmatpush1.xpose.msra.mxu0 0.0
    %152 = vmatprep.subr.mxu0 0.0
    %153 = vmatpush1.xpose.msra.mxu0 0.0
    %154 = vmatprep.subr.mxu0 0.0
    %155 = vmatpush1.xpose.msra.mxu0 0.0
    %156 = vmatprep.subr.mxu0 0.0
    %157 = vmatpush1.xpose.msra.mxu0 0.0
    %158 = vmatprep.subr.mxu0 0.0
    %159 = vmatpush1.xpose.msra.mxu0 0.0
    %160 = vmatprep.subr.mxu0 0.0
    %161 = vmatpush1.xpose.msra.mxu0 0.0
    %162 = vmatprep.subr.mxu0 0.0
    %163 = vmatpush1.xpose.msra.mxu0 0.0
    %164 = vmatprep.subr.mxu0 0.0
    %165 = vmatpush1.xpose.msra.mxu0 0.0
    %166 = vmatprep.subr.mxu0 0.0
    %167 = vmatpush1.xpose.msra.mxu0 0.0
    %168 = vmatprep.mubr.f32.mxu0 0.0
    %169 = vmatmul.mubr.f32.gmra.mrb[0].mxu0 %v95
    %v170 = vpop.f32.mrb[0].mxu0
    %v171 = vadd.f32 0.0, %v170
    %v172 = vpop.f32.mrb[0].mxu0
    %173 = vmatprep.mubr.f32.mxu0 0.0
    %174 = vmatmul.mubr.f32.gmra.mrb[0].mxu0 %v100
    %v175 = vpop.f32.mrb[0].mxu0
    %v176 = vadd.f32 0.0, %v175
    %v177 = vpop.f32.mrb[0].mxu0
    %178 = vdwg.mxu0
    %v179 = vld [vmem:[%s0 + $0x39] sm:$0xf]
    %181 = vset.pattern.permute.xlu0 0
    %182 = vperm.xlu0 %181, %v171
    %v183 = vpop.permute.xlu0 %182
    %186 = vset.pattern.permute.xlu0 0
    %187 = vperm.xlu0 %186, %v176
    %v188 = vpop.permute.xlu0 %187
    %v190 = vmul.f32 %v12, %v183
    %v191 = vmul.f32 %v13, %v188
    %194 = vrot.lane.b32.xlu0 %v95, 96
    %v195 = vpop.permute.xlu0 %194
    %196 = vrot.lane.b32.xlu0 %v100, 96
    %v197 = vpop.permute.xlu0 %196
    %200 = vrot.lane.b32.xlu0 %v190, 96
    %v201 = vpop.permute.xlu0 %200
    %202 = vrot.lane.b32.xlu0 %v191, 96
    %v203 = vpop.permute.xlu0 %202
    %v206 = vsel %vm21, %v95, 0
    %v208 = vsel %vm21, %v100, 0
    %v210 = vsel %vm21, %v195, 0
    %v212 = vsel %vm21, %v197, 0
    %214 = vmatprep.subr.mxu0 0.0
    %215 = vmatpush1.xpose.msra.mxu0 %v210
    %216 = vmatprep.subr.mxu0 0.0
    %217 = vmatpush1.xpose.msra.mxu0 %v212
    %218 = vmatprep.subr.mxu0 0.0
    %219 = vmatpush1.xpose.msra.mxu0 0.0
    %220 = vmatprep.subr.mxu0 0.0
    %221 = vmatpush1.xpose.msra.mxu0 0.0
    %222 = vmatprep.subr.mxu0 0.0
    %223 = vmatpush1.xpose.msra.mxu0 0.0
    %224 = vmatprep.subr.mxu0 0.0
    %225 = vmatpush1.xpose.msra.mxu0 0.0
    %226 = vmatprep.subr.mxu0 0.0
    %227 = vmatpush1.xpose.msra.mxu0 0.0
    %228 = vmatprep.subr.mxu0 0.0
    %229 = vmatpush1.xpose.msra.mxu0 0.0
    %230 = vmatprep.subr.mxu0 0.0
    %231 = vmatpush1.xpose.msra.mxu0 0.0
    %232 = vmatprep.subr.mxu0 0.0
    %233 = vmatpush1.xpose.msra.mxu0 0.0
    %234 = vmatprep.subr.mxu0 0.0
    %235 = vmatpush1.xpose.msra.mxu0 0.0
    %236 = vmatprep.subr.mxu0 0.0
    %237 = vmatpush1.xpose.msra.mxu0 0.0
    %238 = vmatprep.subr.mxu0 0.0
    %239 = vmatpush1.xpose.msra.mxu0 0.0
    %240 = vmatprep.subr.mxu0 0.0
    %241 = vmatpush1.xpose.msra.mxu0 0.0
    %242 = vmatprep.subr.mxu0 0.0
    %243 = vmatpush1.xpose.msra.mxu0 0.0
    %244 = vmatprep.subr.mxu0 0.0
    %245 = vmatpush1.xpose.msra.mxu0 0.0
    %246 = vmatprep.subr.mxu0 0.0
    %247 = vmatpush1.xpose.msra.mxu0 0.0
    %248 = vmatprep.subr.mxu0 0.0
    %249 = vmatpush1.xpose.msra.mxu0 0.0
    %250 = vmatprep.subr.mxu0 0.0
    %251 = vmatpush1.xpose.msra.mxu0 0.0
    %252 = vmatprep.subr.mxu0 0.0
    %253 = vmatpush1.xpose.msra.mxu0 0.0
    %254 = vmatprep.subr.mxu0 0.0
    %255 = vmatpush1.xpose.msra.mxu0 0.0
    %256 = vmatprep.subr.mxu0 0.0
    %257 = vmatpush1.xpose.msra.mxu0 0.0
    %258 = vmatprep.subr.mxu0 0.0
    %259 = vmatpush1.xpose.msra.mxu0 0.0
    %260 = vmatprep.subr.mxu0 0.0
    %261 = vmatpush1.xpose.msra.mxu0 0.0
    %262 = vmatprep.subr.mxu0 0.0
    %263 = vmatpush1.xpose.msra.mxu0 0.0
    %264 = vmatprep.subr.mxu0 0.0
    %265 = vmatpush1.xpose.msra.mxu0 0.0
    %266 = vmatprep.subr.mxu0 0.0
    %267 = vmatpush1.xpose.msra.mxu0 0.0
    %268 = vmatprep.subr.mxu0 0.0
    %269 = vmatpush1.xpose.msra.mxu0 0.0
    %270 = vmatprep.subr.mxu0 0.0
    %271 = vmatpush1.xpose.msra.mxu0 0.0
    %272 = vmatprep.subr.mxu0 0.0
    %273 = vmatpush1.xpose.msra.mxu0 0.0
    %274 = vmatprep.subr.mxu0 0.0
    %275 = vmatpush1.xpose.msra.mxu0 0.0
    %276 = vmatprep.subr.mxu0 0.0
    %277 = vmatpush1.xpose.msra.mxu0 0.0
    %278 = vmatprep.mubr.f32.mxu0 0.0
    %279 = vmatmul.mubr.f32.gmra.mrb[0].mxu0 %v206
    %v280 = vpop.f32.mrb[0].mxu0
    %v281 = vadd.f32 %v201, %v280
    %v282 = vpop.f32.mrb[0].mxu0
    %283 = vmatprep.mubr.f32.mxu0 0.0
    %284 = vmatmul.mubr.f32.gmra.mrb[0].mxu0 %v208
    %v285 = vpop.f32.mrb[0].mxu0
    %v286 = vadd.f32 %v203, %v285
    %v287 = vpop.f32.mrb[0].mxu0
    %288 = vdwg.mxu0
    %289 = vset.pattern.permute.xlu0 2
    %290 = vperm.xlu0 %289, %v171
    %v291 = vpop.permute.xlu0 %290
    %293 = vset.pattern.permute.xlu0 2
    %294 = vperm.xlu0 %293, %v176
    %v295 = vpop.permute.xlu0 %294
    %v297 = vmul.f32 %v12, %v291
    %v298 = vmul.f32 %v13, %v295
    %301 = vrot.lane.b32.xlu0 %v297, 80
    %v302 = vpop.permute.xlu0 %301
    %303 = vrot.lane.b32.xlu0 %v298, 80
    %v304 = vpop.permute.xlu0 %303
    %v307 = vadd.f32 %v281, %v302
    %v308 = vadd.f32 %v286, %v304
    %v309 = vmul.f32 %v307, 0.25
    %v310 = vmul.f32 %v308, 0.25
    %311 = vrot.lane.b32.xlu0 %v12, 112
    %v312 = vpop.permute.xlu0 %311
    %313 = vrot.lane.b32.xlu0 %v13, 112
    %v314 = vpop.permute.xlu0 %313
    %v317 = vadd.f32 %v309, %v312
    %v318 = vadd.f32 %v310, %v314
    %v319 = vsel %vm21, %v317, -inf
    %320 = vmax.xlane.f32.xlu0 %v319
    %v321 = vpop.xlane.xlu0 %320
    %v322 = vsel %vm21, %v318, -inf
    %323 = vmax.xlane.f32.xlu0 %v322
    %v324 = vpop.xlane.xlu0 %323
    %v325 = vsub.f32 %v317, %v321
    %v326 = vsub.f32 %v318, %v324
    %v327 = vmul.f32 %v325, 1.442695
    %v328 = vpow.pop %v327
    %v329 = vmul.f32 %v326, 1.442695
    %v330 = vpow.pop %v329
    %v331 = vsel %vm21, %v328, 0.0
    %332 = vadd.xlane.f32.xlu0 %v331
    %v333 = vpop.xlane.xlu0 %332
    %v334 = vsel %vm21, %v330, 0.0
    %335 = vadd.xlane.f32.xlu0 %v334
    %v336 = vpop.xlane.xlu0 %335
    %v337 = vmax.f32 %v333, 1e-30
    %v338 = vmax.f32 %v336, 1e-30
    %v339 = vrcp.pop %v337
    %v340 = vrcp.pop %v338
    %341 = vrot.lane.b32.xlu0 %v12, 96
    %v342 = vpop.permute.xlu0 %341
    %343 = vrot.lane.b32.xlu0 %v13, 96
    %v344 = vpop.permute.xlu0 %343
    %v347 = vmul.f32 %v328, %v342
    %v348 = vmul.f32 %v330, %v344
    %349 = vrot.lane.b32.xlu0 %v12, 80
    %v350 = vpop.permute.xlu0 %349
    %351 = vrot.lane.b32.xlu0 %v13, 80
    %v352 = vpop.permute.xlu0 %351
    %v355 = vmul.f32 %v328, %v350
    %v356 = vmul.f32 %v330, %v352
    %359 = vrot.lane.b32.xlu0 %v347, 16
    %v360 = vpop.permute.xlu0 %359
    %361 = vrot.lane.b32.xlu0 %v348, 16
    %v362 = vpop.permute.xlu0 %361
    %367 = vrot.lane.b32.xlu0 %v355, 32
    %v368 = vpop.permute.xlu0 %367
    %369 = vrot.lane.b32.xlu0 %v356, 32
    %v370 = vpop.permute.xlu0 %369
    %v373 = vsel %vm21, %v328, %v360
    %v374 = vsel %vm21, %v330, %v362
    %vm375 = vcmask 261120
    %v376 = vsel %vm375, %v373, %v368
    %v377 = vsel %vm375, %v374, %v370
    %v378 = vlaneseq
    %v379 = vshrl.u32 %v378, 7
    %v380 = vsub.s32 0, %v379
    %v381 = vrot.slane %v179, %v380
    %v382 = vlaneseq
    %v383 = vshrl.u32 %v382, 7
    %v384 = vsub.s32 2, %v383
    %v385 = vrot.slane %v179, %v384
    %387 = vrot.lane.b32.xlu0 %v381, 64
    %v388 = vpop.permute.xlu0 %387
    %390 = vrot.lane.b32.xlu0 %v385, 64
    %v391 = vpop.permute.xlu0 %390
    %392 = vrot.lane.b32.xlu0 %v95, 64
    %v393 = vpop.permute.xlu0 %392
    %394 = vrot.lane.b32.xlu0 %v100, 64
    %v395 = vpop.permute.xlu0 %394
    %396 = vrot.lane.b32.xlu0 %v388, 64
    %v397 = vpop.permute.xlu0 %396
    %398 = vrot.lane.b32.xlu0 %v391, 64
    %v399 = vpop.permute.xlu0 %398
    %vm404 = vcmask 392192
    %v406 = vsel %vm404, %v376, 0
    %v409 = vsel %vm404, %v377, 0
    %411 = vmatprep.subr.mxu0 0.0
    %412 = vmatpush1.msra.mxu0 %v393
    %413 = vmatprep.subr.mxu0 0.0
    %414 = vmatpush1.msra.mxu0 %v395
    %415 = vmatprep.subr.mxu0 0.0
    %416 = vmatpush1.msra.mxu0 %v397
    %417 = vmatprep.subr.mxu0 0.0
    %418 = vmatpush1.msra.mxu0 %v397
    %419 = vmatprep.subr.mxu0 0.0
    %420 = vmatpush1.msra.mxu0 %v399
    %421 = vmatprep.subr.mxu0 0.0
    %422 = vmatpush1.msra.mxu0 %v399
    %423 = vmatprep.subr.mxu0 0.0
    %424 = vmatpush1.msra.mxu0 0.0
    %425 = vmatprep.subr.mxu0 0.0
    %426 = vmatpush1.msra.mxu0 0.0
    %427 = vmatprep.subr.mxu0 0.0
    %428 = vmatpush1.msra.mxu0 0.0
    %429 = vmatprep.subr.mxu0 0.0
    %430 = vmatpush1.msra.mxu0 0.0
    %431 = vmatprep.subr.mxu0 0.0
    %432 = vmatpush1.msra.mxu0 0.0
    %433 = vmatprep.subr.mxu0 0.0
    %434 = vmatpush1.msra.mxu0 0.0
    %435 = vmatprep.subr.mxu0 0.0
    %436 = vmatpush1.msra.mxu0 0.0
    %437 = vmatprep.subr.mxu0 0.0
    %438 = vmatpush1.msra.mxu0 0.0
    %439 = vmatprep.subr.mxu0 0.0
    %440 = vmatpush1.msra.mxu0 0.0
    %441 = vmatprep.subr.mxu0 0.0
    %442 = vmatpush1.msra.mxu0 0.0
    %443 = vmatprep.subr.mxu0 0.0
    %444 = vmatpush1.msra.mxu0 0.0
    %445 = vmatprep.subr.mxu0 0.0
    %446 = vmatpush1.msra.mxu0 0.0
    %447 = vmatprep.subr.mxu0 0.0
    %448 = vmatpush1.msra.mxu0 0.0
    %449 = vmatprep.subr.mxu0 0.0
    %450 = vmatpush1.msra.mxu0 0.0
    %451 = vmatprep.subr.mxu0 0.0
    %452 = vmatpush1.msra.mxu0 0.0
    %453 = vmatprep.subr.mxu0 0.0
    %454 = vmatpush1.msra.mxu0 0.0
    %455 = vmatprep.subr.mxu0 0.0
    %456 = vmatpush1.msra.mxu0 0.0
    %457 = vmatprep.subr.mxu0 0.0
    %458 = vmatpush1.msra.mxu0 0.0
    %459 = vmatprep.subr.mxu0 0.0
    %460 = vmatpush1.msra.mxu0 0.0
    %461 = vmatprep.subr.mxu0 0.0
    %462 = vmatpush1.msra.mxu0 0.0
    %463 = vmatprep.subr.mxu0 0.0
    %464 = vmatpush1.msra.mxu0 0.0
    %465 = vmatprep.subr.mxu0 0.0
    %466 = vmatpush1.msra.mxu0 0.0
    %467 = vmatprep.subr.mxu0 0.0
    %468 = vmatpush1.msra.mxu0 0.0
    %469 = vmatprep.subr.mxu0 0.0
    %470 = vmatpush1.msra.mxu0 0.0
    %471 = vmatprep.subr.mxu0 0.0
    %472 = vmatpush1.msra.mxu0 0.0
    %473 = vmatprep.subr.mxu0 0.0
    %474 = vmatpush1.msra.mxu0 0.0
    %475 = vmatprep.mubr.f32.mxu0 0.0
    %476 = vmatmul.mubr.f32.gmra.mrb[0].mxu0 %v406
    %v477 = vpop.f32.mrb[0].mxu0
    %v478 = vadd.f32 0.0, %v477
    %v479 = vpop.f32.mrb[0].mxu0
    %480 = vmatprep.mubr.f32.mxu0 0.0
    %481 = vmatmul.mubr.f32.gmra.mrb[0].mxu0 %v409
    %v482 = vpop.f32.mrb[0].mxu0
    %v483 = vadd.f32 0.0, %v482
    %v484 = vpop.f32.mrb[0].mxu0
    %485 = vdwg.mxu0
    %v486 = vmul.f32 %v478, %v339
    %v487 = vmul.f32 %v483, %v340
    %488 = vset.pattern.permute.xlu0 1
    %489 = vperm.xlu0 %488, %v171
    %v490 = vpop.permute.xlu0 %489
    %492 = vset.pattern.permute.xlu0 1
    %493 = vperm.xlu0 %492, %v176
    %v494 = vpop.permute.xlu0 %493
    %v496 = vmul.f32 %v12, %v490
    %v497 = vmul.f32 %v13, %v494
    %498 = vrot.lane.b32.xlu0 %v95, 112
    %v499 = vpop.permute.xlu0 %498
    %500 = vrot.lane.b32.xlu0 %v100, 112
    %v501 = vpop.permute.xlu0 %500
    %502 = vrot.lane.b32.xlu0 %v95, 80
    %v503 = vpop.permute.xlu0 %502
    %504 = vrot.lane.b32.xlu0 %v100, 80
    %v505 = vpop.permute.xlu0 %504
    %508 = vrot.lane.b32.xlu0 %v496, 96
    %v509 = vpop.permute.xlu0 %508
    %510 = vrot.lane.b32.xlu0 %v497, 96
    %v511 = vpop.permute.xlu0 %510
    %v514 = vsel %vm21, %v499, 0
    %v516 = vsel %vm21, %v501, 0
    %v518 = vsel %vm21, %v503, 0
    %v520 = vsel %vm21, %v505, 0
    %522 = vmatprep.subr.mxu0 0.0
    %523 = vmatpush1.xpose.msra.mxu0 %v518
    %524 = vmatprep.subr.mxu0 0.0
    %525 = vmatpush1.xpose.msra.mxu0 %v520
    %526 = vmatprep.subr.mxu0 0.0
    %527 = vmatpush1.xpose.msra.mxu0 0.0
    %528 = vmatprep.subr.mxu0 0.0
    %529 = vmatpush1.xpose.msra.mxu0 0.0
    %530 = vmatprep.subr.mxu0 0.0
    %531 = vmatpush1.xpose.msra.mxu0 0.0
    %532 = vmatprep.subr.mxu0 0.0
    %533 = vmatpush1.xpose.msra.mxu0 0.0
    %534 = vmatprep.subr.mxu0 0.0
    %535 = vmatpush1.xpose.msra.mxu0 0.0
    %536 = vmatprep.subr.mxu0 0.0
    %537 = vmatpush1.xpose.msra.mxu0 0.0
    %538 = vmatprep.subr.mxu0 0.0
    %539 = vmatpush1.xpose.msra.mxu0 0.0
    %540 = vmatprep.subr.mxu0 0.0
    %541 = vmatpush1.xpose.msra.mxu0 0.0
    %542 = vmatprep.subr.mxu0 0.0
    %543 = vmatpush1.xpose.msra.mxu0 0.0
    %544 = vmatprep.subr.mxu0 0.0
    %545 = vmatpush1.xpose.msra.mxu0 0.0
    %546 = vmatprep.subr.mxu0 0.0
    %547 = vmatpush1.xpose.msra.mxu0 0.0
    %548 = vmatprep.subr.mxu0 0.0
    %549 = vmatpush1.xpose.msra.mxu0 0.0
    %550 = vmatprep.subr.mxu0 0.0
    %551 = vmatpush1.xpose.msra.mxu0 0.0
    %552 = vmatprep.subr.mxu0 0.0
    %553 = vmatpush1.xpose.msra.mxu0 0.0
    %554 = vmatprep.subr.mxu0 0.0
    %555 = vmatpush1.xpose.msra.mxu0 0.0
    %556 = vmatprep.subr.mxu0 0.0
    %557 = vmatpush1.xpose.msra.mxu0 0.0
    %558 = vmatprep.subr.mxu0 0.0
    %559 = vmatpush1.xpose.msra.mxu0 0.0
    %560 = vmatprep.subr.mxu0 0.0
    %561 = vmatpush1.xpose.msra.mxu0 0.0
    %562 = vmatprep.subr.mxu0 0.0
    %563 = vmatpush1.xpose.msra.mxu0 0.0
    %564 = vmatprep.subr.mxu0 0.0
    %565 = vmatpush1.xpose.msra.mxu0 0.0
    %566 = vmatprep.subr.mxu0 0.0
    %567 = vmatpush1.xpose.msra.mxu0 0.0
    %568 = vmatprep.subr.mxu0 0.0
    %569 = vmatpush1.xpose.msra.mxu0 0.0
    %570 = vmatprep.subr.mxu0 0.0
    %571 = vmatpush1.xpose.msra.mxu0 0.0
    %572 = vmatprep.subr.mxu0 0.0
    %573 = vmatpush1.xpose.msra.mxu0 0.0
    %574 = vmatprep.subr.mxu0 0.0
    %575 = vmatpush1.xpose.msra.mxu0 0.0
    %576 = vmatprep.subr.mxu0 0.0
    %577 = vmatpush1.xpose.msra.mxu0 0.0
    %578 = vmatprep.subr.mxu0 0.0
    %579 = vmatpush1.xpose.msra.mxu0 0.0
    %580 = vmatprep.subr.mxu0 0.0
    %581 = vmatpush1.xpose.msra.mxu0 0.0
    %582 = vmatprep.subr.mxu0 0.0
    %583 = vmatpush1.xpose.msra.mxu0 0.0
    %584 = vmatprep.subr.mxu0 0.0
    %585 = vmatpush1.xpose.msra.mxu0 0.0
    %586 = vmatprep.mubr.f32.mxu0 0.0
    %587 = vmatmul.mubr.f32.gmra.mrb[0].mxu0 %v514
    %v588 = vpop.f32.mrb[0].mxu0
    %v589 = vadd.f32 %v509, %v588
    %v590 = vpop.f32.mrb[0].mxu0
    %591 = vmatprep.mubr.f32.mxu0 0.0
    %592 = vmatmul.mubr.f32.gmra.mrb[0].mxu0 %v516
    %v593 = vpop.f32.mrb[0].mxu0
    %v594 = vadd.f32 %v511, %v593
    %v595 = vpop.f32.mrb[0].mxu0
    %596 = vdwg.mxu0
    %597 = vset.pattern.permute.xlu0 3
    %598 = vperm.xlu0 %597, %v171
    %v599 = vpop.permute.xlu0 %598
    %601 = vset.pattern.permute.xlu0 3
    %602 = vperm.xlu0 %601, %v176
    %v603 = vpop.permute.xlu0 %602
    %v605 = vmul.f32 %v12, %v599
    %v606 = vmul.f32 %v13, %v603
    %609 = vrot.lane.b32.xlu0 %v605, 80
    %v610 = vpop.permute.xlu0 %609
    %611 = vrot.lane.b32.xlu0 %v606, 80
    %v612 = vpop.permute.xlu0 %611
    %v615 = vadd.f32 %v589, %v610
    %v616 = vadd.f32 %v594, %v612
    %v617 = vmul.f32 %v615, 0.25
    %v618 = vmul.f32 %v616, 0.25
    %v619 = vadd.f32 %v617, %v312
    %v620 = vadd.f32 %v618, %v314
    %v621 = vsel %vm21, %v619, -inf
    %622 = vmax.xlane.f32.xlu0 %v621
    %v623 = vpop.xlane.xlu0 %622
    %v624 = vsel %vm21, %v620, -inf
    %625 = vmax.xlane.f32.xlu0 %v624
    %v626 = vpop.xlane.xlu0 %625
    %v627 = vsub.f32 %v619, %v623
    %v628 = vsub.f32 %v620, %v626
    %v629 = vmul.f32 %v627, 1.442695
    %v630 = vpow.pop %v629
    %v631 = vmul.f32 %v628, 1.442695
    %v632 = vpow.pop %v631
    %v633 = vsel %vm21, %v630, 0.0
    %634 = vadd.xlane.f32.xlu0 %v633
    %v635 = vpop.xlane.xlu0 %634
    %v636 = vsel %vm21, %v632, 0.0
    %637 = vadd.xlane.f32.xlu0 %v636
    %v638 = vpop.xlane.xlu0 %637
    %v639 = vmax.f32 %v635, 1e-30
    %v640 = vmax.f32 %v638, 1e-30
    %v641 = vrcp.pop %v639
    %v642 = vrcp.pop %v640
    %v643 = vmul.f32 %v630, %v342
    %v644 = vmul.f32 %v632, %v344
    %v645 = vmul.f32 %v630, %v350
    %v646 = vmul.f32 %v632, %v352
    %649 = vrot.lane.b32.xlu0 %v643, 16
    %v650 = vpop.permute.xlu0 %649
    %651 = vrot.lane.b32.xlu0 %v644, 16
    %v652 = vpop.permute.xlu0 %651
    %657 = vrot.lane.b32.xlu0 %v645, 32
    %v658 = vpop.permute.xlu0 %657
    %659 = vrot.lane.b32.xlu0 %v646, 32
    %v660 = vpop.permute.xlu0 %659
    %v663 = vsel %vm21, %v630, %v650
    %v664 = vsel %vm21, %v632, %v652
    %v665 = vsel %vm375, %v663, %v658
    %v666 = vsel %vm375, %v664, %v660
    %v667 = vlaneseq
    %v668 = vshrl.u32 %v667, 7
    %v669 = vsub.s32 1, %v668
    %v670 = vrot.slane %v179, %v669
    %v671 = vlaneseq
    %v672 = vshrl.u32 %v671, 7
    %v673 = vsub.s32 3, %v672
    %v674 = vrot.slane %v179, %v673
    %676 = vrot.lane.b32.xlu0 %v670, 80
    %v677 = vpop.permute.xlu0 %676
    %679 = vrot.lane.b32.xlu0 %v674, 80
    %v680 = vpop.permute.xlu0 %679
    %681 = vrot.lane.b32.xlu0 %v95, 48
    %v682 = vpop.permute.xlu0 %681
    %683 = vrot.lane.b32.xlu0 %v100, 48
    %v684 = vpop.permute.xlu0 %683
    %685 = vrot.lane.b32.xlu0 %v677, 48
    %v686 = vpop.permute.xlu0 %685
    %687 = vrot.lane.b32.xlu0 %v680, 48
    %v688 = vpop.permute.xlu0 %687
    %v694 = vsel %vm404, %v665, 0
    %v697 = vsel %vm404, %v666, 0
    %699 = vmatprep.subr.mxu0 0.0
    %700 = vmatpush1.msra.mxu0 %v682
    %701 = vmatprep.subr.mxu0 0.0
    %702 = vmatpush1.msra.mxu0 %v684
    %703 = vmatprep.subr.mxu0 0.0
    %704 = vmatpush1.msra.mxu0 %v686
    %705 = vmatprep.subr.mxu0 0.0
    %706 = vmatpush1.msra.mxu0 %v686
    %707 = vmatprep.subr.mxu0 0.0
    %708 = vmatpush1.msra.mxu0 %v688
    %709 = vmatprep.subr.mxu0 0.0
    %710 = vmatpush1.msra.mxu0 %v688
    %711 = vmatprep.subr.mxu0 0.0
    %712 = vmatpush1.msra.mxu0 0.0
    %713 = vmatprep.subr.mxu0 0.0
    %714 = vmatpush1.msra.mxu0 0.0
    %715 = vmatprep.subr.mxu0 0.0
    %716 = vmatpush1.msra.mxu0 0.0
    %717 = vmatprep.subr.mxu0 0.0
    %718 = vmatpush1.msra.mxu0 0.0
    %719 = vmatprep.subr.mxu0 0.0
    %720 = vmatpush1.msra.mxu0 0.0
    %721 = vmatprep.subr.mxu0 0.0
    %722 = vmatpush1.msra.mxu0 0.0
    %723 = vmatprep.subr.mxu0 0.0
    %724 = vmatpush1.msra.mxu0 0.0
    %725 = vmatprep.subr.mxu0 0.0
    %726 = vmatpush1.msra.mxu0 0.0
    %727 = vmatprep.subr.mxu0 0.0
    %728 = vmatpush1.msra.mxu0 0.0
    %729 = vmatprep.subr.mxu0 0.0
    %730 = vmatpush1.msra.mxu0 0.0
    %731 = vmatprep.subr.mxu0 0.0
    %732 = vmatpush1.msra.mxu0 0.0
    %733 = vmatprep.subr.mxu0 0.0
    %734 = vmatpush1.msra.mxu0 0.0
    %735 = vmatprep.subr.mxu0 0.0
    %736 = vmatpush1.msra.mxu0 0.0
    %737 = vmatprep.subr.mxu0 0.0
    %738 = vmatpush1.msra.mxu0 0.0
    %739 = vmatprep.subr.mxu0 0.0
    %740 = vmatpush1.msra.mxu0 0.0
    %741 = vmatprep.subr.mxu0 0.0
    %742 = vmatpush1.msra.mxu0 0.0
    %743 = vmatprep.subr.mxu0 0.0
    %744 = vmatpush1.msra.mxu0 0.0
    %745 = vmatprep.subr.mxu0 0.0
    %746 = vmatpush1.msra.mxu0 0.0
    %747 = vmatprep.subr.mxu0 0.0
    %748 = vmatpush1.msra.mxu0 0.0
    %749 = vmatprep.subr.mxu0 0.0
    %750 = vmatpush1.msra.mxu0 0.0
    %751 = vmatprep.subr.mxu0 0.0
    %752 = vmatpush1.msra.mxu0 0.0
    %753 = vmatprep.subr.mxu0 0.0
    %754 = vmatpush1.msra.mxu0 0.0
    %755 = vmatprep.subr.mxu0 0.0
    %756 = vmatpush1.msra.mxu0 0.0
    %757 = vmatprep.subr.mxu0 0.0
    %758 = vmatpush1.msra.mxu0 0.0
    %759 = vmatprep.subr.mxu0 0.0
    %760 = vmatpush1.msra.mxu0 0.0
    %761 = vmatprep.subr.mxu0 0.0
    %762 = vmatpush1.msra.mxu0 0.0
    %763 = vmatprep.mubr.f32.mxu0 0.0
    %764 = vmatmul.mubr.f32.gmra.mrb[0].mxu0 %v694
    %v765 = vpop.f32.mrb[0].mxu0
    %v766 = vadd.f32 0.0, %v765
    %v767 = vpop.f32.mrb[0].mxu0
    %768 = vmatprep.mubr.f32.mxu0 0.0
    %769 = vmatmul.mubr.f32.gmra.mrb[0].mxu0 %v697
    %v770 = vpop.f32.mrb[0].mxu0
    %v771 = vadd.f32 0.0, %v770
    %v772 = vpop.f32.mrb[0].mxu0
    %773 = vdwg.mxu0
    %v774 = vmul.f32 %v766, %v641
    %v775 = vmul.f32 %v771, %v642
    %778 = vrot.lane.b32.xlu0 %v774, 16
    %v779 = vpop.permute.xlu0 %778
    %780 = vrot.lane.b32.xlu0 %v775, 16
    %v781 = vpop.permute.xlu0 %780
    %v784 = vsel %vm21, %v486, %v779
    %v785 = vsel %vm21, %v487, %v781
    %v786 = vld [vmem:[%s0 + $0x38] sm:$0x1]
    %v787 = vsel %vm375, %v784, %v393
    %v788 = vsel %vm375, %v785, %v395
    %v789 = vlaneseq
    %v790 = vshrl.u32 %v789, 7
    %v791 = vsub.s32 0, %v790
    %v792 = vrot.slane %v786, %v791
    %v793 = vmul.f32 %v787, %v792
    %v794 = vmul.f32 %v788, %v792
    %vm795 = vcmask 523264
    %v796 = vsel %vm795, %v793, 0.0
    %797 = vadd.xlane.f32.xlu0 %v796
    %v798 = vpop.xlane.xlu0 %797
    %v799 = vsel %vm795, %v794, 0.0
    %800 = vadd.xlane.f32.xlu0 %v799
    %v801 = vpop.xlane.xlu0 %800
    %v802 = vxor.u32 %v798, 2147483648
    %v803 = vxor.u32 %v801, 2147483648
    %v804 = vmul.f32 %v802, 1.442695
    %v805 = vpow.pop %v804
    %v806 = vmul.f32 %v803, 1.442695
    %v807 = vpow.pop %v806
    %v808 = vadd.f32 %v805, 1.0
    %v809 = vadd.f32 %v807, 1.0
    %v810 = vrcp.pop %v808
    %v811 = vmul.f32 1.0, %v810
    %v812 = vrcp.pop %v809
    %v813 = vmul.f32 1.0, %v812
    %v814 = vmul.f32 %v811, %v95
    %v815 = vmul.f32 %v813, %v100
    %v816 = vsub.f32 1.0, %v811
    %v817 = vsub.f32 1.0, %v813
    %v818 = vmul.f32 %v816, %v784
    %v819 = vmul.f32 %v817, %v785
    %822 = vrot.lane.b32.xlu0 %v818, 96
    %v823 = vpop.permute.xlu0 %822
    %824 = vrot.lane.b32.xlu0 %v819, 96
    %v825 = vpop.permute.xlu0 %824
    %v828 = vadd.f32 %v814, %v823
    %v829 = vadd.f32 %v815, %v825
    %v830 = vld [vmem:[%s0 + $0x35] sm:$0x1]
    %v831 = vld [vmem:[%s0 + $0x36] sm:$0x1]
    %v832 = vld [vmem:[%s0 + $0x37] sm:$0x1]
    %vm833 = vcmask 1048320
    %v834 = vsel %vm833, %v828, 0.0
    %v835 = vsel %vm833, %v829, 0.0
    %v836 = vadd.f32 %v834, %v835
    %v837 = vrot.slane %v836, 4
    %v838 = vadd.f32 %v836, %v837
    %v839 = vrot.slane %v838, 2
    %v840 = vadd.f32 %v838, %v839
    %v841 = vrot.slane %v840, 1
    %v842 = vadd.f32 %v840, %v841
    %v843 = vrcp.pop 16.0
    %v844 = vmul.f32 %v842, %v843
    %846 = vrot.lane.b32.xlu0 %v832, 96
    %v847 = vpop.permute.xlu0 %846
    %v849 = vmul.f32 %v844, %v847
    %v850 = vlaneseq
    %v851 = vshrl.u32 %v850, 7
    %v852 = vsub.s32 0, %v851
    %v853 = vrot.slane %v849, %v852
    %v854 = vsub.f32 %v828, %v853
    %v855 = vsub.f32 %v829, %v853
    %v856 = vmul.f32 %v854, %v854
    %v857 = vmul.f32 %v855, %v855
    %v858 = vsel %vm833, %v856, 0.0
    %v859 = vsel %vm833, %v857, 0.0
    %v860 = vadd.f32 %v858, %v859
    %v861 = vrot.slane %v860, 4
    %v862 = vadd.f32 %v860, %v861
    %v863 = vrot.slane %v862, 2
    %v864 = vadd.f32 %v862, %v863
    %v865 = vrot.slane %v864, 1
    %v866 = vadd.f32 %v864, %v865
    %v867 = vmul.f32 %v866, %v843
    %v868 = vlaneseq
    %v869 = vshrl.u32 %v868, 7
    %v870 = vsub.s32 0, %v869
    %v871 = vrot.slane %v830, %v870
    %874 = vrot.lane.b32.xlu0 %v854, 32
    %v875 = vpop.permute.xlu0 %874
    %876 = vrot.lane.b32.xlu0 %v855, 32
    %v877 = vpop.permute.xlu0 %876
    %v880 = vmul.f32 %v871, %v875
    %v881 = vmul.f32 %v871, %v877
    %v882 = vadd.f32 %v867, 1e-05
    %v883 = vrsqrt.pop %v882
    %885 = vrot.lane.b32.xlu0 %v883, 32
    %v886 = vpop.permute.xlu0 %885
    %v888 = vmul.f32 %v880, %v886
    %v889 = vmul.f32 %v881, %v886
    %v890 = vlaneseq
    %v891 = vshrl.u32 %v890, 7
    %v892 = vsub.s32 0, %v891
    %v893 = vrot.slane %v831, %v892
    %v894 = vadd.f32 %v888, %v893
    %v895 = vadd.f32 %v889, %v893
    %v896 = vmax.f32 %v894, 0.0
    %v897 = vmax.f32 %v895, 0.0
    %v898 = vld [vmem:[%s0 + $0x10] sm:$0xff]
    %v899 = vld [vmem:[%s0 + $0x18] sm:$0xff]
    %v900 = vld [vmem:[%s0 + $0x20] sm:$0xff]
    %v901 = vld [vmem:[%s0 + $0x28] sm:$0xff]
    %v902 = vld [vmem:[%s0 + $0x40] sm:$0x1]
    %v903 = vlaneseq
    %v904 = vshrl.u32 %v903, 7
    %v905 = vsub.s32 0, %v904
    %v906 = vrot.slane %v902, %v905
    %v908 = vsel %vm375, %v896, 0
    %v911 = vsel %vm375, %v897, 0
    %913 = vmatprep.subr.mxu0 0.0
    %914 = vmatpush1.msra.mxu0 %v898
    %915 = vmatprep.subr.mxu0 0.0
    %916 = vmatpush1.msra.mxu0 %v899
    %917 = vmatprep.subr.mxu0 0.0
    %918 = vmatpush1.msra.mxu0 %v900
    %919 = vmatprep.subr.mxu0 0.0
    %920 = vmatpush1.msra.mxu0 %v901
    %921 = vmatprep.subr.mxu0 0.0
    %922 = vmatpush1.msra.mxu0 0.0
    %923 = vmatprep.subr.mxu0 0.0
    %924 = vmatpush1.msra.mxu0 0.0
    %925 = vmatprep.subr.mxu0 0.0
    %926 = vmatpush1.msra.mxu0 0.0
    %927 = vmatprep.subr.mxu0 0.0
    %928 = vmatpush1.msra.mxu0 0.0
    %929 = vmatprep.subr.mxu0 0.0
    %930 = vmatpush1.msra.mxu0 0.0
    %931 = vmatprep.subr.mxu0 0.0
    %932 = vmatpush1.msra.mxu0 0.0
    %933 = vmatprep.subr.mxu0 0.0
    %934 = vmatpush1.msra.mxu0 0.0
    %935 = vmatprep.subr.mxu0 0.0
    %936 = vmatpush1.msra.mxu0 0.0
    %937 = vmatprep.subr.mxu0 0.0
    %938 = vmatpush1.msra.mxu0 0.0
    %939 = vmatprep.subr.mxu0 0.0
    %940 = vmatpush1.msra.mxu0 0.0
    %941 = vmatprep.subr.mxu0 0.0
    %942 = vmatpush1.msra.mxu0 0.0
    %943 = vmatprep.subr.mxu0 0.0
    %944 = vmatpush1.msra.mxu0 0.0
    %945 = vmatprep.subr.mxu0 0.0
    %946 = vmatpush1.msra.mxu0 0.0
    %947 = vmatprep.subr.mxu0 0.0
    %948 = vmatpush1.msra.mxu0 0.0
    %949 = vmatprep.subr.mxu0 0.0
    %950 = vmatpush1.msra.mxu0 0.0
    %951 = vmatprep.subr.mxu0 0.0
    %952 = vmatpush1.msra.mxu0 0.0
    %953 = vmatprep.subr.mxu0 0.0
    %954 = vmatpush1.msra.mxu0 0.0
    %955 = vmatprep.subr.mxu0 0.0
    %956 = vmatpush1.msra.mxu0 0.0
    %957 = vmatprep.subr.mxu0 0.0
    %958 = vmatpush1.msra.mxu0 0.0
    %959 = vmatprep.subr.mxu0 0.0
    %960 = vmatpush1.msra.mxu0 0.0
    %961 = vmatprep.subr.mxu0 0.0
    %962 = vmatpush1.msra.mxu0 0.0
    %963 = vmatprep.subr.mxu0 0.0
    %964 = vmatpush1.msra.mxu0 0.0
    %965 = vmatprep.subr.mxu0 0.0
    %966 = vmatpush1.msra.mxu0 0.0
    %967 = vmatprep.subr.mxu0 0.0
    %968 = vmatpush1.msra.mxu0 0.0
    %969 = vmatprep.subr.mxu0 0.0
    %970 = vmatpush1.msra.mxu0 0.0
    %971 = vmatprep.subr.mxu0 0.0
    %972 = vmatpush1.msra.mxu0 0.0
    %973 = vmatprep.subr.mxu0 0.0
    %974 = vmatpush1.msra.mxu0 0.0
    %975 = vmatprep.subr.mxu0 0.0
    %976 = vmatpush1.msra.mxu0 0.0
    %977 = vmatprep.mubr.f32.mxu0 0.0
    %978 = vmatmul.mubr.f32.gmra.mrb[0].mxu0 %v908
    %v979 = vpop.f32.mrb[0].mxu0
    %v980 = vadd.f32 %v906, %v979
    %v981 = vpop.f32.mrb[0].mxu0
    %982 = vmatprep.mubr.f32.mxu0 0.0
    %983 = vmatmul.mubr.f32.gmra.mrb[0].mxu0 %v911
    %v984 = vpop.f32.mrb[0].mxu0
    %v985 = vadd.f32 %v906, %v984
    %v986 = vpop.f32.mrb[0].mxu0
    %987 = vdwg.mxu0
    %v988 = vld [vmem:[%s0 + $0x41] sm:$0xf]
    %989 = vmatprep.subr.mxu0 0.0
    %990 = vmatpush1.xpose.msra.mxu0 %v988
    %991 = vmatprep.subr.mxu0 0.0
    %992 = vmatpush1.xpose.msra.mxu0 0.0
    %993 = vmatprep.subr.mxu0 0.0
    %994 = vmatpush1.xpose.msra.mxu0 0.0
    %995 = vmatprep.subr.mxu0 0.0
    %996 = vmatpush1.xpose.msra.mxu0 0.0
    %997 = vmatprep.subr.mxu0 0.0
    %998 = vmatpush1.xpose.msra.mxu0 0.0
    %999 = vmatprep.subr.mxu0 0.0
    %1000 = vmatpush1.xpose.msra.mxu0 0.0
    %1001 = vmatprep.subr.mxu0 0.0
    %1002 = vmatpush1.xpose.msra.mxu0 0.0
    %1003 = vmatprep.subr.mxu0 0.0
    %1004 = vmatpush1.xpose.msra.mxu0 0.0
    %1005 = vmatprep.subr.mxu0 0.0
    %1006 = vmatpush1.xpose.msra.mxu0 0.0
    %1007 = vmatprep.subr.mxu0 0.0
    %1008 = vmatpush1.xpose.msra.mxu0 0.0
    %1009 = vmatprep.subr.mxu0 0.0
    %1010 = vmatpush1.xpose.msra.mxu0 0.0
    %1011 = vmatprep.subr.mxu0 0.0
    %1012 = vmatpush1.xpose.msra.mxu0 0.0
    %1013 = vmatprep.subr.mxu0 0.0
    %1014 = vmatpush1.xpose.msra.mxu0 0.0
    %1015 = vmatprep.subr.mxu0 0.0
    %1016 = vmatpush1.xpose.msra.mxu0 0.0
    %1017 = vmatprep.subr.mxu0 0.0
    %1018 = vmatpush1.xpose.msra.mxu0 0.0
    %1019 = vmatprep.subr.mxu0 0.0
    %1020 = vmatpush1.xpose.msra.mxu0 0.0
    %1021 = vmatprep.subr.mxu0 0.0
    %1022 = vmatpush1.xpose.msra.mxu0 0.0
    %1023 = vmatprep.subr.mxu0 0.0
    %1024 = vmatpush1.xpose.msra.mxu0 0.0
    %1025 = vmatprep.subr.mxu0 0.0
    %1026 = vmatpush1.xpose.msra.mxu0 0.0
    %1027 = vmatprep.subr.mxu0 0.0
    %1028 = vmatpush1.xpose.msra.mxu0 0.0
    %1029 = vmatprep.subr.mxu0 0.0
    %1030 = vmatpush1.xpose.msra.mxu0 0.0
    %1031 = vmatprep.subr.mxu0 0.0
    %1032 = vmatpush1.xpose.msra.mxu0 0.0
    %1033 = vmatprep.subr.mxu0 0.0
    %1034 = vmatpush1.xpose.msra.mxu0 0.0
    %1035 = vmatprep.subr.mxu0 0.0
    %1036 = vmatpush1.xpose.msra.mxu0 0.0
    %1037 = vmatprep.subr.mxu0 0.0
    %1038 = vmatpush1.xpose.msra.mxu0 0.0
    %1039 = vmatprep.subr.mxu0 0.0
    %1040 = vmatpush1.xpose.msra.mxu0 0.0
    %1041 = vmatprep.subr.mxu0 0.0
    %1042 = vmatpush1.xpose.msra.mxu0 0.0
    %1043 = vmatprep.subr.mxu0 0.0
    %1044 = vmatpush1.xpose.msra.mxu0 0.0
    %1045 = vmatprep.subr.mxu0 0.0
    %1046 = vmatpush1.xpose.msra.mxu0 0.0
    %1047 = vmatprep.subr.mxu0 0.0
    %1048 = vmatpush1.xpose.msra.mxu0 0.0
    %1049 = vmatprep.subr.mxu0 0.0
    %1050 = vmatpush1.xpose.msra.mxu0 0.0
    %1051 = vmatprep.subr.mxu0 0.0
    %1052 = vmatpush1.xpose.msra.mxu0 0.0
    %1053 = vmatprep.mubr.f32.mxu0 0.0
    %1054 = vmatmul.mubr.f32.gmra.mrb[0].mxu0 %v980
    %v1055 = vpop.f32.mrb[0].mxu0
    %v1056 = vadd.f32 0.0, %v1055
    %v1057 = vpop.f32.mrb[0].mxu0
    %1058 = vmatprep.mubr.f32.mxu0 0.0
    %1059 = vmatmul.mubr.f32.gmra.mrb[0].mxu0 %v985
    %v1060 = vpop.f32.mrb[0].mxu0
    %v1061 = vadd.f32 0.0, %v1060
    %v1062 = vpop.f32.mrb[0].mxu0
    %1063 = vdwg.mxu0
    %v1064 = vld [vmem:[%s0 + $0x49] sm:$0xf]
    %1066 = vset.pattern.permute.xlu0 0
    %1067 = vperm.xlu0 %1066, %v1056
    %v1068 = vpop.permute.xlu0 %1067
    %1071 = vset.pattern.permute.xlu0 0
    %1072 = vperm.xlu0 %1071, %v1061
    %v1073 = vpop.permute.xlu0 %1072
    %v1075 = vmul.f32 %v12, %v1068
    %v1076 = vmul.f32 %v13, %v1073
    %1079 = vrot.lane.b32.xlu0 %v980, 96
    %v1080 = vpop.permute.xlu0 %1079
    %1081 = vrot.lane.b32.xlu0 %v985, 96
    %v1082 = vpop.permute.xlu0 %1081
    %1085 = vrot.lane.b32.xlu0 %v1075, 96
    %v1086 = vpop.permute.xlu0 %1085
    %1087 = vrot.lane.b32.xlu0 %v1076, 96
    %v1088 = vpop.permute.xlu0 %1087
    %v1091 = vsel %vm21, %v980, 0
    %v1093 = vsel %vm21, %v985, 0
    %v1095 = vsel %vm21, %v1080, 0
    %v1097 = vsel %vm21, %v1082, 0
    %1099 = vmatprep.subr.mxu0 0.0
    %1100 = vmatpush1.xpose.msra.mxu0 %v1095
    %1101 = vmatprep.subr.mxu0 0.0
    %1102 = vmatpush1.xpose.msra.mxu0 %v1097
    %1103 = vmatprep.subr.mxu0 0.0
    %1104 = vmatpush1.xpose.msra.mxu0 0.0
    %1105 = vmatprep.subr.mxu0 0.0
    %1106 = vmatpush1.xpose.msra.mxu0 0.0
    %1107 = vmatprep.subr.mxu0 0.0
    %1108 = vmatpush1.xpose.msra.mxu0 0.0
    %1109 = vmatprep.subr.mxu0 0.0
    %1110 = vmatpush1.xpose.msra.mxu0 0.0
    %1111 = vmatprep.subr.mxu0 0.0
    %1112 = vmatpush1.xpose.msra.mxu0 0.0
    %1113 = vmatprep.subr.mxu0 0.0
    %1114 = vmatpush1.xpose.msra.mxu0 0.0
    %1115 = vmatprep.subr.mxu0 0.0
    %1116 = vmatpush1.xpose.msra.mxu0 0.0
    %1117 = vmatprep.subr.mxu0 0.0
    %1118 = vmatpush1.xpose.msra.mxu0 0.0
    %1119 = vmatprep.subr.mxu0 0.0
    %1120 = vmatpush1.xpose.msra.mxu0 0.0
    %1121 = vmatprep.subr.mxu0 0.0
    %1122 = vmatpush1.xpose.msra.mxu0 0.0
    %1123 = vmatprep.subr.mxu0 0.0
    %1124 = vmatpush1.xpose.msra.mxu0 0.0
    %1125 = vmatprep.subr.mxu0 0.0
    %1126 = vmatpush1.xpose.msra.mxu0 0.0
    %1127 = vmatprep.subr.mxu0 0.0
    %1128 = vmatpush1.xpose.msra.mxu0 0.0
    %1129 = vmatprep.subr.mxu0 0.0
    %1130 = vmatpush1.xpose.msra.mxu0 0.0
    %1131 = vmatprep.subr.mxu0 0.0
    %1132 = vmatpush1.xpose.msra.mxu0 0.0
    %1133 = vmatprep.subr.mxu0 0.0
    %1134 = vmatpush1.xpose.msra.mxu0 0.0
    %1135 = vmatprep.subr.mxu0 0.0
    %1136 = vmatpush1.xpose.msra.mxu0 0.0
    %1137 = vmatprep.subr.mxu0 0.0
    %1138 = vmatpush1.xpose.msra.mxu0 0.0
    %1139 = vmatprep.subr.mxu0 0.0
    %1140 = vmatpush1.xpose.msra.mxu0 0.0
    %1141 = vmatprep.subr.mxu0 0.0
    %1142 = vmatpush1.xpose.msra.mxu0 0.0
    %1143 = vmatprep.subr.mxu0 0.0
    %1144 = vmatpush1.xpose.msra.mxu0 0.0
    %1145 = vmatprep.subr.mxu0 0.0
    %1146 = vmatpush1.xpose.msra.mxu0 0.0
    %1147 = vmatprep.subr.mxu0 0.0
    %1148 = vmatpush1.xpose.msra.mxu0 0.0
    %1149 = vmatprep.subr.mxu0 0.0
    %1150 = vmatpush1.xpose.msra.mxu0 0.0
    %1151 = vmatprep.subr.mxu0 0.0
    %1152 = vmatpush1.xpose.msra.mxu0 0.0
    %1153 = vmatprep.subr.mxu0 0.0
    %1154 = vmatpush1.xpose.msra.mxu0 0.0
    %1155 = vmatprep.subr.mxu0 0.0
    %1156 = vmatpush1.xpose.msra.mxu0 0.0
    %1157 = vmatprep.subr.mxu0 0.0
    %1158 = vmatpush1.xpose.msra.mxu0 0.0
    %1159 = vmatprep.subr.mxu0 0.0
    %1160 = vmatpush1.xpose.msra.mxu0 0.0
    %1161 = vmatprep.subr.mxu0 0.0
    %1162 = vmatpush1.xpose.msra.mxu0 0.0
    %1163 = vmatprep.mubr.f32.mxu0 0.0
    %1164 = vmatmul.mubr.f32.gmra.mrb[0].mxu0 %v1091
    %v1165 = vpop.f32.mrb[0].mxu0
    %v1166 = vadd.f32 %v1086, %v1165
    %v1167 = vpop.f32.mrb[0].mxu0
    %1168 = vmatprep.mubr.f32.mxu0 0.0
    %1169 = vmatmul.mubr.f32.gmra.mrb[0].mxu0 %v1093
    %v1170 = vpop.f32.mrb[0].mxu0
    %v1171 = vadd.f32 %v1088, %v1170
    %v1172 = vpop.f32.mrb[0].mxu0
    %1173 = vdwg.mxu0
    %1174 = vset.pattern.permute.xlu0 2
    %1175 = vperm.xlu0 %1174, %v1056
    %v1176 = vpop.permute.xlu0 %1175
    %1178 = vset.pattern.permute.xlu0 2
    %1179 = vperm.xlu0 %1178, %v1061
    %v1180 = vpop.permute.xlu0 %1179
    %v1182 = vmul.f32 %v12, %v1176
    %v1183 = vmul.f32 %v13, %v1180
    %1186 = vrot.lane.b32.xlu0 %v1182, 80
    %v1187 = vpop.permute.xlu0 %1186
    %1188 = vrot.lane.b32.xlu0 %v1183, 80
    %v1189 = vpop.permute.xlu0 %1188
    %v1192 = vadd.f32 %v1166, %v1187
    %v1193 = vadd.f32 %v1171, %v1189
    %v1194 = vmul.f32 %v1192, 0.25
    %v1195 = vmul.f32 %v1193, 0.25
    %v1196 = vadd.f32 %v1194, %v312
    %v1197 = vadd.f32 %v1195, %v314
    %v1198 = vsel %vm21, %v1196, -inf
    %1199 = vmax.xlane.f32.xlu0 %v1198
    %v1200 = vpop.xlane.xlu0 %1199
    %v1201 = vsel %vm21, %v1197, -inf
    %1202 = vmax.xlane.f32.xlu0 %v1201
    %v1203 = vpop.xlane.xlu0 %1202
    %v1204 = vsub.f32 %v1196, %v1200
    %v1205 = vsub.f32 %v1197, %v1203
    %v1206 = vmul.f32 %v1204, 1.442695
    %v1207 = vpow.pop %v1206
    %v1208 = vmul.f32 %v1205, 1.442695
    %v1209 = vpow.pop %v1208
    %v1210 = vsel %vm21, %v1207, 0.0
    %1211 = vadd.xlane.f32.xlu0 %v1210
    %v1212 = vpop.xlane.xlu0 %1211
    %v1213 = vsel %vm21, %v1209, 0.0
    %1214 = vadd.xlane.f32.xlu0 %v1213
    %v1215 = vpop.xlane.xlu0 %1214
    %v1216 = vmax.f32 %v1212, 1e-30
    %v1217 = vmax.f32 %v1215, 1e-30
    %v1218 = vrcp.pop %v1216
    %v1219 = vrcp.pop %v1217
    %v1220 = vmul.f32 %v1207, %v342
    %v1221 = vmul.f32 %v1209, %v344
    %v1222 = vmul.f32 %v1207, %v350
    %v1223 = vmul.f32 %v1209, %v352
    %1226 = vrot.lane.b32.xlu0 %v1220, 16
    %v1227 = vpop.permute.xlu0 %1226
    %1228 = vrot.lane.b32.xlu0 %v1221, 16
    %v1229 = vpop.permute.xlu0 %1228
    %1234 = vrot.lane.b32.xlu0 %v1222, 32
    %v1235 = vpop.permute.xlu0 %1234
    %1236 = vrot.lane.b32.xlu0 %v1223, 32
    %v1237 = vpop.permute.xlu0 %1236
    %v1240 = vsel %vm21, %v1207, %v1227
    %v1241 = vsel %vm21, %v1209, %v1229
    %v1242 = vsel %vm375, %v1240, %v1235
    %v1243 = vsel %vm375, %v1241, %v1237
    %v1244 = vlaneseq
    %v1245 = vshrl.u32 %v1244, 7
    %v1246 = vsub.s32 0, %v1245
    %v1247 = vrot.slane %v1064, %v1246
    %v1248 = vlaneseq
    %v1249 = vshrl.u32 %v1248, 7
    %v1250 = vsub.s32 2, %v1249
    %v1251 = vrot.slane %v1064, %v1250
    %1253 = vrot.lane.b32.xlu0 %v1247, 64
    %v1254 = vpop.permute.xlu0 %1253
    %1256 = vrot.lane.b32.xlu0 %v1251, 64
    %v1257 = vpop.permute.xlu0 %1256
    %1258 = vrot.lane.b32.xlu0 %v980, 64
    %v1259 = vpop.permute.xlu0 %1258
    %1260 = vrot.lane.b32.xlu0 %v985, 64
    %v1261 = vpop.permute.xlu0 %1260
    %1262 = vrot.lane.b32.xlu0 %v1254, 64
    %v1263 = vpop.permute.xlu0 %1262
    %1264 = vrot.lane.b32.xlu0 %v1257, 64
    %v1265 = vpop.permute.xlu0 %1264
    %v1271 = vsel %vm404, %v1242, 0
    %v1274 = vsel %vm404, %v1243, 0
    %1276 = vmatprep.subr.mxu0 0.0
    %1277 = vmatpush1.msra.mxu0 %v1259
    %1278 = vmatprep.subr.mxu0 0.0
    %1279 = vmatpush1.msra.mxu0 %v1261
    %1280 = vmatprep.subr.mxu0 0.0
    %1281 = vmatpush1.msra.mxu0 %v1263
    %1282 = vmatprep.subr.mxu0 0.0
    %1283 = vmatpush1.msra.mxu0 %v1263
    %1284 = vmatprep.subr.mxu0 0.0
    %1285 = vmatpush1.msra.mxu0 %v1265
    %1286 = vmatprep.subr.mxu0 0.0
    %1287 = vmatpush1.msra.mxu0 %v1265
    %1288 = vmatprep.subr.mxu0 0.0
    %1289 = vmatpush1.msra.mxu0 0.0
    %1290 = vmatprep.subr.mxu0 0.0
    %1291 = vmatpush1.msra.mxu0 0.0
    %1292 = vmatprep.subr.mxu0 0.0
    %1293 = vmatpush1.msra.mxu0 0.0
    %1294 = vmatprep.subr.mxu0 0.0
    %1295 = vmatpush1.msra.mxu0 0.0
    %1296 = vmatprep.subr.mxu0 0.0
    %1297 = vmatpush1.msra.mxu0 0.0
    %1298 = vmatprep.subr.mxu0 0.0
    %1299 = vmatpush1.msra.mxu0 0.0
    %1300 = vmatprep.subr.mxu0 0.0
    %1301 = vmatpush1.msra.mxu0 0.0
    %1302 = vmatprep.subr.mxu0 0.0
    %1303 = vmatpush1.msra.mxu0 0.0
    %1304 = vmatprep.subr.mxu0 0.0
    %1305 = vmatpush1.msra.mxu0 0.0
    %1306 = vmatprep.subr.mxu0 0.0
    %1307 = vmatpush1.msra.mxu0 0.0
    %1308 = vmatprep.subr.mxu0 0.0
    %1309 = vmatpush1.msra.mxu0 0.0
    %1310 = vmatprep.subr.mxu0 0.0
    %1311 = vmatpush1.msra.mxu0 0.0
    %1312 = vmatprep.subr.mxu0 0.0
    %1313 = vmatpush1.msra.mxu0 0.0
    %1314 = vmatprep.subr.mxu0 0.0
    %1315 = vmatpush1.msra.mxu0 0.0
    %1316 = vmatprep.subr.mxu0 0.0
    %1317 = vmatpush1.msra.mxu0 0.0
    %1318 = vmatprep.subr.mxu0 0.0
    %1319 = vmatpush1.msra.mxu0 0.0
    %1320 = vmatprep.subr.mxu0 0.0
    %1321 = vmatpush1.msra.mxu0 0.0
    %1322 = vmatprep.subr.mxu0 0.0
    %1323 = vmatpush1.msra.mxu0 0.0
    %1324 = vmatprep.subr.mxu0 0.0
    %1325 = vmatpush1.msra.mxu0 0.0
    %1326 = vmatprep.subr.mxu0 0.0
    %1327 = vmatpush1.msra.mxu0 0.0
    %1328 = vmatprep.subr.mxu0 0.0
    %1329 = vmatpush1.msra.mxu0 0.0
    %1330 = vmatprep.subr.mxu0 0.0
    %1331 = vmatpush1.msra.mxu0 0.0
    %1332 = vmatprep.subr.mxu0 0.0
    %1333 = vmatpush1.msra.mxu0 0.0
    %1334 = vmatprep.subr.mxu0 0.0
    %1335 = vmatpush1.msra.mxu0 0.0
    %1336 = vmatprep.subr.mxu0 0.0
    %1337 = vmatpush1.msra.mxu0 0.0
    %1338 = vmatprep.subr.mxu0 0.0
    %1339 = vmatpush1.msra.mxu0 0.0
    %1340 = vmatprep.mubr.f32.mxu0 0.0
    %1341 = vmatmul.mubr.f32.gmra.mrb[0].mxu0 %v1271
    %v1342 = vpop.f32.mrb[0].mxu0
    %v1343 = vadd.f32 0.0, %v1342
    %v1344 = vpop.f32.mrb[0].mxu0
    %1345 = vmatprep.mubr.f32.mxu0 0.0
    %1346 = vmatmul.mubr.f32.gmra.mrb[0].mxu0 %v1274
    %v1347 = vpop.f32.mrb[0].mxu0
    %v1348 = vadd.f32 0.0, %v1347
    %v1349 = vpop.f32.mrb[0].mxu0
    %1350 = vdwg.mxu0
    %v1351 = vmul.f32 %v1343, %v1218
    %v1352 = vmul.f32 %v1348, %v1219
    %1353 = vset.pattern.permute.xlu0 1
    %1354 = vperm.xlu0 %1353, %v1056
    %v1355 = vpop.permute.xlu0 %1354
    %1357 = vset.pattern.permute.xlu0 1
    %1358 = vperm.xlu0 %1357, %v1061
    %v1359 = vpop.permute.xlu0 %1358
    %v1361 = vmul.f32 %v12, %v1355
    %v1362 = vmul.f32 %v13, %v1359
    %1363 = vrot.lane.b32.xlu0 %v980, 112
    %v1364 = vpop.permute.xlu0 %1363
    %1365 = vrot.lane.b32.xlu0 %v985, 112
    %v1366 = vpop.permute.xlu0 %1365
    %1367 = vrot.lane.b32.xlu0 %v980, 80
    %v1368 = vpop.permute.xlu0 %1367
    %1369 = vrot.lane.b32.xlu0 %v985, 80
    %v1370 = vpop.permute.xlu0 %1369
    %1373 = vrot.lane.b32.xlu0 %v1361, 96
    %v1374 = vpop.permute.xlu0 %1373
    %1375 = vrot.lane.b32.xlu0 %v1362, 96
    %v1376 = vpop.permute.xlu0 %1375
    %v1379 = vsel %vm21, %v1364, 0
    %v1381 = vsel %vm21, %v1366, 0
    %v1383 = vsel %vm21, %v1368, 0
    %v1385 = vsel %vm21, %v1370, 0
    %1387 = vmatprep.subr.mxu0 0.0
    %1388 = vmatpush1.xpose.msra.mxu0 %v1383
    %1389 = vmatprep.subr.mxu0 0.0
    %1390 = vmatpush1.xpose.msra.mxu0 %v1385
    %1391 = vmatprep.subr.mxu0 0.0
    %1392 = vmatpush1.xpose.msra.mxu0 0.0
    %1393 = vmatprep.subr.mxu0 0.0
    %1394 = vmatpush1.xpose.msra.mxu0 0.0
    %1395 = vmatprep.subr.mxu0 0.0
    %1396 = vmatpush1.xpose.msra.mxu0 0.0
    %1397 = vmatprep.subr.mxu0 0.0
    %1398 = vmatpush1.xpose.msra.mxu0 0.0
    %1399 = vmatprep.subr.mxu0 0.0
    %1400 = vmatpush1.xpose.msra.mxu0 0.0
    %1401 = vmatprep.subr.mxu0 0.0
    %1402 = vmatpush1.xpose.msra.mxu0 0.0
    %1403 = vmatprep.subr.mxu0 0.0
    %1404 = vmatpush1.xpose.msra.mxu0 0.0
    %1405 = vmatprep.subr.mxu0 0.0
    %1406 = vmatpush1.xpose.msra.mxu0 0.0
    %1407 = vmatprep.subr.mxu0 0.0
    %1408 = vmatpush1.xpose.msra.mxu0 0.0
    %1409 = vmatprep.subr.mxu0 0.0
    %1410 = vmatpush1.xpose.msra.mxu0 0.0
    %1411 = vmatprep.subr.mxu0 0.0
    %1412 = vmatpush1.xpose.msra.mxu0 0.0
    %1413 = vmatprep.subr.mxu0 0.0
    %1414 = vmatpush1.xpose.msra.mxu0 0.0
    %1415 = vmatprep.subr.mxu0 0.0
    %1416 = vmatpush1.xpose.msra.mxu0 0.0
    %1417 = vmatprep.subr.mxu0 0.0
    %1418 = vmatpush1.xpose.msra.mxu0 0.0
    %1419 = vmatprep.subr.mxu0 0.0
    %1420 = vmatpush1.xpose.msra.mxu0 0.0
    %1421 = vmatprep.subr.mxu0 0.0
    %1422 = vmatpush1.xpose.msra.mxu0 0.0
    %1423 = vmatprep.subr.mxu0 0.0
    %1424 = vmatpush1.xpose.msra.mxu0 0.0
    %1425 = vmatprep.subr.mxu0 0.0
    %1426 = vmatpush1.xpose.msra.mxu0 0.0
    %1427 = vmatprep.subr.mxu0 0.0
    %1428 = vmatpush1.xpose.msra.mxu0 0.0
    %1429 = vmatprep.subr.mxu0 0.0
    %1430 = vmatpush1.xpose.msra.mxu0 0.0
    %1431 = vmatprep.subr.mxu0 0.0
    %1432 = vmatpush1.xpose.msra.mxu0 0.0
    %1433 = vmatprep.subr.mxu0 0.0
    %1434 = vmatpush1.xpose.msra.mxu0 0.0
    %1435 = vmatprep.subr.mxu0 0.0
    %1436 = vmatpush1.xpose.msra.mxu0 0.0
    %1437 = vmatprep.subr.mxu0 0.0
    %1438 = vmatpush1.xpose.msra.mxu0 0.0
    %1439 = vmatprep.subr.mxu0 0.0
    %1440 = vmatpush1.xpose.msra.mxu0 0.0
    %1441 = vmatprep.subr.mxu0 0.0
    %1442 = vmatpush1.xpose.msra.mxu0 0.0
    %1443 = vmatprep.subr.mxu0 0.0
    %1444 = vmatpush1.xpose.msra.mxu0 0.0
    %1445 = vmatprep.subr.mxu0 0.0
    %1446 = vmatpush1.xpose.msra.mxu0 0.0
    %1447 = vmatprep.subr.mxu0 0.0
    %1448 = vmatpush1.xpose.msra.mxu0 0.0
    %1449 = vmatprep.subr.mxu0 0.0
    %1450 = vmatpush1.xpose.msra.mxu0 0.0
    %1451 = vmatprep.mubr.f32.mxu0 0.0
    %1452 = vmatmul.mubr.f32.gmra.mrb[0].mxu0 %v1379
    %v1453 = vpop.f32.mrb[0].mxu0
    %v1454 = vadd.f32 %v1374, %v1453
    %v1455 = vpop.f32.mrb[0].mxu0
    %1456 = vmatprep.mubr.f32.mxu0 0.0
    %1457 = vmatmul.mubr.f32.gmra.mrb[0].mxu0 %v1381
    %v1458 = vpop.f32.mrb[0].mxu0
    %v1459 = vadd.f32 %v1376, %v1458
    %v1460 = vpop.f32.mrb[0].mxu0
    %1461 = vdwg.mxu0
    %1462 = vset.pattern.permute.xlu0 3
    %1463 = vperm.xlu0 %1462, %v1056
    %v1464 = vpop.permute.xlu0 %1463
    %1466 = vset.pattern.permute.xlu0 3
    %1467 = vperm.xlu0 %1466, %v1061
    %v1468 = vpop.permute.xlu0 %1467
    %v1470 = vmul.f32 %v12, %v1464
    %v1471 = vmul.f32 %v13, %v1468
    %1474 = vrot.lane.b32.xlu0 %v1470, 80
    %v1475 = vpop.permute.xlu0 %1474
    %1476 = vrot.lane.b32.xlu0 %v1471, 80
    %v1477 = vpop.permute.xlu0 %1476
    %v1480 = vadd.f32 %v1454, %v1475
    %v1481 = vadd.f32 %v1459, %v1477
    %v1482 = vmul.f32 %v1480, 0.25
    %v1483 = vmul.f32 %v1481, 0.25
    %v1484 = vadd.f32 %v1482, %v312
    %v1485 = vadd.f32 %v1483, %v314
    %v1486 = vsel %vm21, %v1484, -inf
    %1487 = vmax.xlane.f32.xlu0 %v1486
    %v1488 = vpop.xlane.xlu0 %1487
    %v1489 = vsel %vm21, %v1485, -inf
    %1490 = vmax.xlane.f32.xlu0 %v1489
    %v1491 = vpop.xlane.xlu0 %1490
    %v1492 = vsub.f32 %v1484, %v1488
    %v1493 = vsub.f32 %v1485, %v1491
    %v1494 = vmul.f32 %v1492, 1.442695
    %v1495 = vpow.pop %v1494
    %v1496 = vmul.f32 %v1493, 1.442695
    %v1497 = vpow.pop %v1496
    %v1498 = vsel %vm21, %v1495, 0.0
    %1499 = vadd.xlane.f32.xlu0 %v1498
    %v1500 = vpop.xlane.xlu0 %1499
    %v1501 = vsel %vm21, %v1497, 0.0
    %1502 = vadd.xlane.f32.xlu0 %v1501
    %v1503 = vpop.xlane.xlu0 %1502
    %v1504 = vmax.f32 %v1500, 1e-30
    %v1505 = vmax.f32 %v1503, 1e-30
    %v1506 = vrcp.pop %v1504
    %v1507 = vrcp.pop %v1505
    %v1508 = vmul.f32 %v1495, %v342
    %v1509 = vmul.f32 %v1497, %v344
    %v1510 = vmul.f32 %v1495, %v350
    %v1511 = vmul.f32 %v1497, %v352
    %1514 = vrot.lane.b32.xlu0 %v1508, 16
    %v1515 = vpop.permute.xlu0 %1514
    %1516 = vrot.lane.b32.xlu0 %v1509, 16
    %v1517 = vpop.permute.xlu0 %1516
    %1522 = vrot.lane.b32.xlu0 %v1510, 32
    %v1523 = vpop.permute.xlu0 %1522
    %1524 = vrot.lane.b32.xlu0 %v1511, 32
    %v1525 = vpop.permute.xlu0 %1524
    %v1528 = vsel %vm21, %v1495, %v1515
    %v1529 = vsel %vm21, %v1497, %v1517
    %v1530 = vsel %vm375, %v1528, %v1523
    %v1531 = vsel %vm375, %v1529, %v1525
    %v1532 = vlaneseq
    %v1533 = vshrl.u32 %v1532, 7
    %v1534 = vsub.s32 1, %v1533
    %v1535 = vrot.slane %v1064, %v1534
    %v1536 = vlaneseq
    %v1537 = vshrl.u32 %v1536, 7
    %v1538 = vsub.s32 3, %v1537
    %v1539 = vrot.slane %v1064, %v1538
    %1541 = vrot.lane.b32.xlu0 %v1535, 80
    %v1542 = vpop.permute.xlu0 %1541
    %1544 = vrot.lane.b32.xlu0 %v1539, 80
    %v1545 = vpop.permute.xlu0 %1544
    %1546 = vrot.lane.b32.xlu0 %v980, 48
    %v1547 = vpop.permute.xlu0 %1546
    %1548 = vrot.lane.b32.xlu0 %v985, 48
    %v1549 = vpop.permute.xlu0 %1548
    %1550 = vrot.lane.b32.xlu0 %v1542, 48
    %v1551 = vpop.permute.xlu0 %1550
    %1552 = vrot.lane.b32.xlu0 %v1545, 48
    %v1553 = vpop.permute.xlu0 %1552
    %v1559 = vsel %vm404, %v1530, 0
    %v1562 = vsel %vm404, %v1531, 0
    %1564 = vmatprep.subr.mxu0 0.0
    %1565 = vmatpush1.msra.mxu0 %v1547
    %1566 = vmatprep.subr.mxu0 0.0
    %1567 = vmatpush1.msra.mxu0 %v1549
    %1568 = vmatprep.subr.mxu0 0.0
    %1569 = vmatpush1.msra.mxu0 %v1551
    %1570 = vmatprep.subr.mxu0 0.0
    %1571 = vmatpush1.msra.mxu0 %v1551
    %1572 = vmatprep.subr.mxu0 0.0
    %1573 = vmatpush1.msra.mxu0 %v1553
    %1574 = vmatprep.subr.mxu0 0.0
    %1575 = vmatpush1.msra.mxu0 %v1553
    %1576 = vmatprep.subr.mxu0 0.0
    %1577 = vmatpush1.msra.mxu0 0.0
    %1578 = vmatprep.subr.mxu0 0.0
    %1579 = vmatpush1.msra.mxu0 0.0
    %1580 = vmatprep.subr.mxu0 0.0
    %1581 = vmatpush1.msra.mxu0 0.0
    %1582 = vmatprep.subr.mxu0 0.0
    %1583 = vmatpush1.msra.mxu0 0.0
    %1584 = vmatprep.subr.mxu0 0.0
    %1585 = vmatpush1.msra.mxu0 0.0
    %1586 = vmatprep.subr.mxu0 0.0
    %1587 = vmatpush1.msra.mxu0 0.0
    %1588 = vmatprep.subr.mxu0 0.0
    %1589 = vmatpush1.msra.mxu0 0.0
    %1590 = vmatprep.subr.mxu0 0.0
    %1591 = vmatpush1.msra.mxu0 0.0
    %1592 = vmatprep.subr.mxu0 0.0
    %1593 = vmatpush1.msra.mxu0 0.0
    %1594 = vmatprep.subr.mxu0 0.0
    %1595 = vmatpush1.msra.mxu0 0.0
    %1596 = vmatprep.subr.mxu0 0.0
    %1597 = vmatpush1.msra.mxu0 0.0
    %1598 = vmatprep.subr.mxu0 0.0
    %1599 = vmatpush1.msra.mxu0 0.0
    %1600 = vmatprep.subr.mxu0 0.0
    %1601 = vmatpush1.msra.mxu0 0.0
    %1602 = vmatprep.subr.mxu0 0.0
    %1603 = vmatpush1.msra.mxu0 0.0
    %1604 = vmatprep.subr.mxu0 0.0
    %1605 = vmatpush1.msra.mxu0 0.0
    %1606 = vmatprep.subr.mxu0 0.0
    %1607 = vmatpush1.msra.mxu0 0.0
    %1608 = vmatprep.subr.mxu0 0.0
    %1609 = vmatpush1.msra.mxu0 0.0
    %1610 = vmatprep.subr.mxu0 0.0
    %1611 = vmatpush1.msra.mxu0 0.0
    %1612 = vmatprep.subr.mxu0 0.0
    %1613 = vmatpush1.msra.mxu0 0.0
    %1614 = vmatprep.subr.mxu0 0.0
    %1615 = vmatpush1.msra.mxu0 0.0
    %1616 = vmatprep.subr.mxu0 0.0
    %1617 = vmatpush1.msra.mxu0 0.0
    %1618 = vmatprep.subr.mxu0 0.0
    %1619 = vmatpush1.msra.mxu0 0.0
    %1620 = vmatprep.subr.mxu0 0.0
    %1621 = vmatpush1.msra.mxu0 0.0
    %1622 = vmatprep.subr.mxu0 0.0
    %1623 = vmatpush1.msra.mxu0 0.0
    %1624 = vmatprep.subr.mxu0 0.0
    %1625 = vmatpush1.msra.mxu0 0.0
    %1626 = vmatprep.subr.mxu0 0.0
    %1627 = vmatpush1.msra.mxu0 0.0
    %1628 = vmatprep.mubr.f32.mxu0 0.0
    %1629 = vmatmul.mubr.f32.gmra.mrb[0].mxu0 %v1559
    %v1630 = vpop.f32.mrb[0].mxu0
    %v1631 = vadd.f32 0.0, %v1630
    %v1632 = vpop.f32.mrb[0].mxu0
    %1633 = vmatprep.mubr.f32.mxu0 0.0
    %1634 = vmatmul.mubr.f32.gmra.mrb[0].mxu0 %v1562
    %v1635 = vpop.f32.mrb[0].mxu0
    %v1636 = vadd.f32 0.0, %v1635
    %v1637 = vpop.f32.mrb[0].mxu0
    %1638 = vdwg.mxu0
    %v1639 = vmul.f32 %v1631, %v1506
    %v1640 = vmul.f32 %v1636, %v1507
    %1643 = vrot.lane.b32.xlu0 %v1639, 16
    %v1644 = vpop.permute.xlu0 %1643
    %1645 = vrot.lane.b32.xlu0 %v1640, 16
    %v1646 = vpop.permute.xlu0 %1645
    %v1649 = vsel %vm21, %v1351, %v1644
    %v1650 = vsel %vm21, %v1352, %v1646
    %v1651 = vld [vmem:[%s0 + $0x48] sm:$0x1]
    %v1652 = vsel %vm375, %v1649, %v1259
    %v1653 = vsel %vm375, %v1650, %v1261
    %v1654 = vlaneseq
    %v1655 = vshrl.u32 %v1654, 7
    %v1656 = vsub.s32 0, %v1655
    %v1657 = vrot.slane %v1651, %v1656
    %v1658 = vmul.f32 %v1652, %v1657
    %v1659 = vmul.f32 %v1653, %v1657
    %v1660 = vsel %vm795, %v1658, 0.0
    %1661 = vadd.xlane.f32.xlu0 %v1660
    %v1662 = vpop.xlane.xlu0 %1661
    %v1663 = vsel %vm795, %v1659, 0.0
    %1664 = vadd.xlane.f32.xlu0 %v1663
    %v1665 = vpop.xlane.xlu0 %1664
    %v1666 = vxor.u32 %v1662, 2147483648
    %v1667 = vxor.u32 %v1665, 2147483648
    %v1668 = vmul.f32 %v1666, 1.442695
    %v1669 = vpow.pop %v1668
    %v1670 = vmul.f32 %v1667, 1.442695
    %v1671 = vpow.pop %v1670
    %v1672 = vadd.f32 %v1669, 1.0
    %v1673 = vadd.f32 %v1671, 1.0
    %v1674 = vrcp.pop %v1672
    %v1675 = vmul.f32 1.0, %v1674
    %v1676 = vrcp.pop %v1673
    %v1677 = vmul.f32 1.0, %v1676
    %v1678 = vmul.f32 %v1675, %v980
    %v1679 = vmul.f32 %v1677, %v985
    %v1680 = vsub.f32 1.0, %v1675
    %v1681 = vsub.f32 1.0, %v1677
    %v1682 = vmul.f32 %v1680, %v1649
    %v1683 = vmul.f32 %v1681, %v1650
    %1686 = vrot.lane.b32.xlu0 %v1682, 96
    %v1687 = vpop.permute.xlu0 %1686
    %1688 = vrot.lane.b32.xlu0 %v1683, 96
    %v1689 = vpop.permute.xlu0 %1688
    %v1692 = vadd.f32 %v1678, %v1687
    %v1693 = vadd.f32 %v1679, %v1689
    %v1694 = vld [vmem:[%s0 + $0x45] sm:$0x1]
    %v1695 = vld [vmem:[%s0 + $0x46] sm:$0x1]
    %v1696 = vld [vmem:[%s0 + $0x47] sm:$0x1]
    %v1697 = vsel %vm833, %v1692, 0.0
    %v1698 = vsel %vm833, %v1693, 0.0
    %v1699 = vadd.f32 %v1697, %v1698
    %v1700 = vrot.slane %v1699, 4
    %v1701 = vadd.f32 %v1699, %v1700
    %v1702 = vrot.slane %v1701, 2
    %v1703 = vadd.f32 %v1701, %v1702
    %v1704 = vrot.slane %v1703, 1
    %v1705 = vadd.f32 %v1703, %v1704
    %v1706 = vmul.f32 %v1705, %v843
    %1708 = vrot.lane.b32.xlu0 %v1696, 96
    %v1709 = vpop.permute.xlu0 %1708
    %v1711 = vmul.f32 %v1706, %v1709
    %v1712 = vlaneseq
    %v1713 = vshrl.u32 %v1712, 7
    %v1714 = vsub.s32 0, %v1713
    %v1715 = vrot.slane %v1711, %v1714
    %v1716 = vsub.f32 %v1692, %v1715
    %v1717 = vsub.f32 %v1693, %v1715
    %v1718 = vmul.f32 %v1716, %v1716
    %v1719 = vmul.f32 %v1717, %v1717
    %v1720 = vsel %vm833, %v1718, 0.0
    %v1721 = vsel %vm833, %v1719, 0.0
    %v1722 = vadd.f32 %v1720, %v1721
    %v1723 = vrot.slane %v1722, 4
    %v1724 = vadd.f32 %v1722, %v1723
    %v1725 = vrot.slane %v1724, 2
    %v1726 = vadd.f32 %v1724, %v1725
    %v1727 = vrot.slane %v1726, 1
    %v1728 = vadd.f32 %v1726, %v1727
    %v1729 = vmul.f32 %v1728, %v843
    %v1730 = vlaneseq
    %v1731 = vshrl.u32 %v1730, 7
    %v1732 = vsub.s32 0, %v1731
    %v1733 = vrot.slane %v1694, %v1732
    %1736 = vrot.lane.b32.xlu0 %v1716, 32
    %v1737 = vpop.permute.xlu0 %1736
    %1738 = vrot.lane.b32.xlu0 %v1717, 32
    %v1739 = vpop.permute.xlu0 %1738
    %v1742 = vmul.f32 %v1733, %v1737
    %v1743 = vmul.f32 %v1733, %v1739
    %v1744 = vadd.f32 %v1729, 1e-05
    %v1745 = vrsqrt.pop %v1744
    %1747 = vrot.lane.b32.xlu0 %v1745, 32
    %v1748 = vpop.permute.xlu0 %1747
    %v1750 = vmul.f32 %v1742, %v1748
    %v1751 = vmul.f32 %v1743, %v1748
    %v1752 = vlaneseq
    %v1753 = vshrl.u32 %v1752, 7
    %v1754 = vsub.s32 0, %v1753
    %v1755 = vrot.slane %v1695, %v1754
    %v1756 = vadd.f32 %v1750, %v1755
    %v1757 = vadd.f32 %v1751, %v1755
    %v1758 = vmax.f32 %v1756, 0.0
    %v1759 = vmax.f32 %v1757, 0.0
    %1760 = vxpose.xlu0.b32.start [1/16] %v1758, 128
    %1761 = vxpose.xlu0.b32.cont [2/16] %v1759, 128
    %1762 = vxpose.xlu0.b32.cont [3/16] 0.0, 128
    %1763 = vxpose.xlu0.b32.cont [4/16] 0.0, 128
    %1764 = vxpose.xlu0.b32.cont [5/16] 0.0, 128
    %1765 = vxpose.xlu0.b32.cont [6/16] 0.0, 128
    %1766 = vxpose.xlu0.b32.cont [7/16] 0.0, 128
    %1767 = vxpose.xlu0.b32.cont [8/16] 0.0, 128
    %1768 = vxpose.xlu0.b32.cont [9/16] 0.0, 128
    %1769 = vxpose.xlu0.b32.cont [10/16] 0.0, 128
    %1770 = vxpose.xlu0.b32.cont [11/16] 0.0, 128
    %1771 = vxpose.xlu0.b32.cont [12/16] 0.0, 128
    %1772 = vxpose.xlu0.b32.cont [13/16] 0.0, 128
    %1773 = vxpose.xlu0.b32.cont [14/16] 0.0, 128
    %1774 = vxpose.xlu0.b32.cont [15/16] 0.0, 128
    %1775 = vxpose.xlu0.b32.end [16/16] 0.0, 128
    %v1776 = vpop.trf.xlu0
    %v1777 = vpop.trf.xlu0
    %v1778 = vpop.trf.xlu0
    %v1779 = vpop.trf.xlu0
    %v1780 = vpop.trf.xlu0
    %v1781 = vpop.trf.xlu0
    %v1782 = vpop.trf.xlu0
    %v1783 = vpop.trf.xlu0
    %v1784 = vpop.trf.xlu0
    %v1785 = vpop.trf.xlu0
    %v1786 = vpop.trf.xlu0
    %v1787 = vpop.trf.xlu0
    %v1788 = vpop.trf.xlu0
    %v1789 = vpop.trf.xlu0
    %v1790 = vpop.trf.xlu0
    %v1791 = vpop.trf.xlu0
    %v1793 = vsel %vm21, %v1776, 0
    %v1796 = vsel %vm21, %v1777, 0
    %v1799 = vsel %vm21, %v1778, 0
    %v1802 = vsel %vm21, %v1779, 0
    %1804 = vmatprep.subr.mxu0 0.0
    %1805 = vmatpush1.msra.mxu0 %v1758
    %1806 = vmatprep.subr.mxu0 0.0
    %1807 = vmatpush1.msra.mxu0 %v1759
    %1808 = vmatprep.subr.mxu0 0.0
    %1809 = vmatpush1.msra.mxu0 0.0
    %1810 = vmatprep.subr.mxu0 0.0
    %1811 = vmatpush1.msra.mxu0 0.0
    %1812 = vmatprep.subr.mxu0 0.0
    %1813 = vmatpush1.msra.mxu0 0.0
    %1814 = vmatprep.subr.mxu0 0.0
    %1815 = vmatpush1.msra.mxu0 0.0
    %1816 = vmatprep.subr.mxu0 0.0
    %1817 = vmatpush1.msra.mxu0 0.0
    %1818 = vmatprep.subr.mxu0 0.0
    %1819 = vmatpush1.msra.mxu0 0.0
    %1820 = vmatprep.subr.mxu0 0.0
    %1821 = vmatpush1.msra.mxu0 0.0
    %1822 = vmatprep.subr.mxu0 0.0
    %1823 = vmatpush1.msra.mxu0 0.0
    %1824 = vmatprep.subr.mxu0 0.0
    %1825 = vmatpush1.msra.mxu0 0.0
    %1826 = vmatprep.subr.mxu0 0.0
    %1827 = vmatpush1.msra.mxu0 0.0
    %1828 = vmatprep.subr.mxu0 0.0
    %1829 = vmatpush1.msra.mxu0 0.0
    %1830 = vmatprep.subr.mxu0 0.0
    %1831 = vmatpush1.msra.mxu0 0.0
    %1832 = vmatprep.subr.mxu0 0.0
    %1833 = vmatpush1.msra.mxu0 0.0
    %1834 = vmatprep.subr.mxu0 0.0
    %1835 = vmatpush1.msra.mxu0 0.0
    %1836 = vmatprep.subr.mxu0 0.0
    %1837 = vmatpush1.msra.mxu0 0.0
    %1838 = vmatprep.subr.mxu0 0.0
    %1839 = vmatpush1.msra.mxu0 0.0
    %1840 = vmatprep.subr.mxu0 0.0
    %1841 = vmatpush1.msra.mxu0 0.0
    %1842 = vmatprep.subr.mxu0 0.0
    %1843 = vmatpush1.msra.mxu0 0.0
    %1844 = vmatprep.subr.mxu0 0.0
    %1845 = vmatpush1.msra.mxu0 0.0
    %1846 = vmatprep.subr.mxu0 0.0
    %1847 = vmatpush1.msra.mxu0 0.0
    %1848 = vmatprep.subr.mxu0 0.0
    %1849 = vmatpush1.msra.mxu0 0.0
    %1850 = vmatprep.subr.mxu0 0.0
    %1851 = vmatpush1.msra.mxu0 0.0
    %1852 = vmatprep.subr.mxu0 0.0
    %1853 = vmatpush1.msra.mxu0 0.0
    %1854 = vmatprep.subr.mxu0 0.0
    %1855 = vmatpush1.msra.mxu0 0.0
    %1856 = vmatprep.subr.mxu0 0.0
    %1857 = vmatpush1.msra.mxu0 0.0
    %1858 = vmatprep.subr.mxu0 0.0
    %1859 = vmatpush1.msra.mxu0 0.0
    %1860 = vmatprep.subr.mxu0 0.0
    %1861 = vmatpush1.msra.mxu0 0.0
    %1862 = vmatprep.subr.mxu0 0.0
    %1863 = vmatpush1.msra.mxu0 0.0
    %1864 = vmatprep.subr.mxu0 0.0
    %1865 = vmatpush1.msra.mxu0 0.0
    %1866 = vmatprep.subr.mxu0 0.0
    %1867 = vmatpush1.msra.mxu0 0.0
    %1868 = vmatprep.mubr.f32.mxu0 0.0
    %1869 = vmatmul.mubr.f32.gmra.mrb[0].mxu0 %v1793
    %v1870 = vpop.f32.mrb[0].mxu0
    %v1871 = vadd.f32 0.0, %v1870
    %v1872 = vpop.f32.mrb[0].mxu0
    %1873 = vmatprep.mubr.f32.mxu0 0.0
    %1874 = vmatmul.mubr.f32.gmra.mrb[0].mxu0 %v1796
    %v1875 = vpop.f32.mrb[0].mxu0
    %v1876 = vadd.f32 0.0, %v1875
    %v1877 = vpop.f32.mrb[0].mxu0
    %1878 = vmatprep.mubr.f32.mxu0 0.0
    %1879 = vmatmul.mubr.f32.gmra.mrb[0].mxu0 %v1799
    %v1880 = vpop.f32.mrb[0].mxu0
    %v1881 = vadd.f32 0.0, %v1880
    %v1882 = vpop.f32.mrb[0].mxu0
    %1883 = vmatprep.mubr.f32.mxu0 0.0
    %1884 = vmatmul.mubr.f32.gmra.mrb[0].mxu0 %v1802
    %v1885 = vpop.f32.mrb[0].mxu0
    %v1886 = vadd.f32 0.0, %v1885
    %v1887 = vpop.f32.mrb[0].mxu0
    %1888 = vdwg.mxu0
    %v1889 = vsel %vm375, %v1871, inf
    %1890 = vmin.xlane.f32.xlu0 %v1889
    %v1891 = vpop.xlane.xlu0 %1890
    %v1892 = vsel %vm375, %v1876, inf
    %1893 = vmin.xlane.f32.xlu0 %v1892
    %v1894 = vpop.xlane.xlu0 %1893
    %v1895 = vsel %vm375, %v1881, inf
    %1896 = vmin.xlane.f32.xlu0 %v1895
    %v1897 = vpop.xlane.xlu0 %1896
    %v1898 = vsel %vm375, %v1886, inf
    %1899 = vmin.xlane.f32.xlu0 %v1898
    %v1900 = vpop.xlane.xlu0 %1899
    %v1901 = vmin.f32 %v1891, %v1894
    %v1902 = vmin.f32 %v1897, %v1900
    %v1903 = vmin.f32 %v1901, %v1902
    %v1904 = vrot.slane %v1903, 4
    %v1905 = vmin.f32 %v1903, %v1904
    %v1906 = vrot.slane %v1905, 2
    %v1907 = vmin.f32 %v1905, %v1906
    %v1908 = vrot.slane %v1907, 1
    %v1909 = vmin.f32 %v1907, %v1908
    %v1910 = vsel %vm375, %v1871, -inf
    %1911 = vmax.xlane.f32.xlu0 %v1910
    %v1912 = vpop.xlane.xlu0 %1911
    %v1913 = vsel %vm375, %v1876, -inf
    %1914 = vmax.xlane.f32.xlu0 %v1913
    %v1915 = vpop.xlane.xlu0 %1914
    %v1916 = vsel %vm375, %v1881, -inf
    %1917 = vmax.xlane.f32.xlu0 %v1916
    %v1918 = vpop.xlane.xlu0 %1917
    %v1919 = vsel %vm375, %v1886, -inf
    %1920 = vmax.xlane.f32.xlu0 %v1919
    %v1921 = vpop.xlane.xlu0 %1920
    %v1922 = vmax.f32 %v1912, %v1915
    %v1923 = vmax.f32 %v1918, %v1921
    %v1924 = vmax.f32 %v1922, %v1923
    %v1925 = vrot.slane %v1924, 4
    %v1926 = vmax.f32 %v1924, %v1925
    %v1927 = vrot.slane %v1926, 2
    %v1928 = vmax.f32 %v1926, %v1927
    %v1929 = vrot.slane %v1928, 1
    %v1930 = vmax.f32 %v1928, %v1929
    %v1931 = vsub.f32 %v1930, %v1909
    %v1932 = vadd.f32 %v1931, 1e-08
    %v1933 = vrcp.pop %v1932
    %v1934 = vsub.f32 %v1871, %v1909
    %v1935 = vsub.f32 %v1876, %v1909
    %v1936 = vsub.f32 %v1881, %v1909
    %v1937 = vsub.f32 %v1886, %v1909
    %v1938 = vmul.f32 %v1934, %v1933
    %v1939 = vmul.f32 %v1935, %v1933
    %v1940 = vmul.f32 %v1936, %v1933
    %v1941 = vmul.f32 %v1937, %v1933
    %v1942 = vsel %vm375, %v1938, 0.0
    %v1943 = vsel %vm375, %v1939, 0.0
    %v1944 = vsel %vm375, %v1940, 0.0
    %v1945 = vsel %vm375, %v1941, 0.0
    %1946 = vst [vmem:[#allocation2] sm:$0xff] %v1942
    %1947 = vst [vmem:[#allocation2 + $0x8] sm:$0xff] %v1943
    %1948 = vst [vmem:[#allocation2 + $0x10] sm:$0xff] %v1944
    %1949 = vst [vmem:[#allocation2 + $0x18] sm:$0xff] %v1945
    // Predicated region
    $region10: #{direct_sr_forward.1} parent=1 // pred_check
      _
    $region11: #{direct_sr_forward.1} parent=1 // pred_check_branch
      %1951 = sbr.rel (0) target = $region13
    $region12: #{direct_sr_forward.1} parent=1 // pred_region
      %s1953 = ssub.s32 512, 512
      %1954 = vsyncadd [#allocation3], %s1953
      %s1955 = sshll.u32 [#allocation2], 4
      %s1956 = int_to_ptr.vmem [resolvable:$true] %s1955
      %1961 = dma.vmem_to_hbm [thread:$0]  %s1956, 512, %s2, [#allocation3], 128, 128, 8
    $region13: #{direct_sr_forward.1} parent=1 // pred_fallthru
      _
    // Predicated region
    $region14: #{direct_sr_forward.1} parent=1 // pred_check
      _
    $region15: #{direct_sr_forward.1} parent=1 // pred_check_branch
      %1963 = sbr.rel (0) target = $region17
    $region16: #{direct_sr_forward.1} parent=1 // pred_region
      %1964 = dma.done [#allocation3], 512
    $region17: #{direct_sr_forward.1} parent=1 // pred_fallthru
      _
    %1965 = vsyncpa [#allocation3], 1

</llo_original>
